<compile_context>
chip_gen: v6e
topology: v6e:2x2x1
jax: 0.10.0
libtpu: 0.0.40
codegen_flags: <defaults>
</compile_context>

<pallas_src>
import jax
import jax.numpy as jnp
import numpy as np
from jax.experimental import pallas as pl
from jax.experimental.pallas import tpu as pltpu


def _round_up(x: int, m: int) -> int:
    return (x + m - 1) // m * m


def _pick_tile_h(h: int, w: int, target_rows: int = 1024) -> int:
    """Row-tile height: a divisor of h (multiple of 8 unless == h) such that
    TILE_H * W is roughly `target_rows` pixels per grid step."""
    if h * w <= target_rows:
        return h
    cap = max(8, target_rows // w)
    for t in range(min(h, cap), 7, -1):
        if h % t == 0 and t % 8 == 0:
            return t
    if h % 8 == 0:
        return 8
    return h


def _bilinear_matrix(out_size: int, in_size: int) -> jnp.ndarray:
    """(out_size, in_size) 1-D interpolation factor matching
    torch.nn.functional.interpolate(mode='bilinear', align_corners=False)."""
    i = jnp.arange(out_size, dtype=jnp.float32)
    src = (i + 0.5) * (in_size / out_size) - 0.5
    src = jnp.maximum(src, 0.0)                       # PyTorch clamps negative src to 0
    lo = jnp.clip(jnp.floor(src).astype(jnp.int32), 0, in_size - 1)
    hi = jnp.minimum(lo + 1, in_size - 1)
    frac = src - lo.astype(jnp.float32)
    return ((1.0 - frac)[:, None] * jax.nn.one_hot(lo, in_size, dtype=jnp.float32)
            + frac[:, None] * jax.nn.one_hot(hi, in_size, dtype=jnp.float32))


# -----------------------------------------------------------------------------
# Kernel: per (batch, row-tile) fused 1x1conv(+folded BN)+ReLU + separable
# bilinear resize of the state + add.
# -----------------------------------------------------------------------------
def _fpn_lateral_kernel(lat_ref, state_ref, rowm_ref, colm_ref, w_ref,
                        shift_ref, out_ref):
    # lat_ref:   (1, TILE_H, W, Cin_p)   bf16  lateral row tile (NHWC, channels padded)
    # state_ref: (1, Hs, Ws*Cout_p)      bf16  full low-res state for this batch element
    # rowm_ref:  (TILE_H, Hs)            bf16  row-interp factor slice for this tile
    # colm_ref:  (W, Ws)                 bf16  column-interp factor
    # w_ref:     (Cin_p, Cout_p)         bf16  conv 1x1 weight with BN scale folded in
    # shift_ref: (1, Cout_p)             f32   folded BN shift
    # out_ref:   (1, TILE_H, W, Cout_p)  f32
    _, tile_h, wd, cin_p = lat_ref.shape
    cout_p = out_ref.shape[-1]
    ws = colm_ref.shape[-1]

    # --- 1x1 conv (BN scale folded into weight) + shift + ReLU -----------------
    lat2d = lat_ref[0].reshape(tile_h * wd, cin_p)           # layout-preserving merge
    y = jnp.dot(lat2d, w_ref[...], preferred_element_type=jnp.float32)
    y = jnp.maximum(y + shift_ref[...], 0.0)                 # (TILE_H*W, Cout_p) f32

    # --- separable bilinear resize of the state onto this row tile -------------
    # rows: (TILE_H, Hs) @ (Hs, Ws*Cout_p) -> (TILE_H, Ws*Cout_p), f32 accumulate
    s = jnp.dot(rowm_ref[...], state_ref[0], preferred_element_type=jnp.float32)
    s = s.reshape(tile_h, ws, cout_p).astype(jnp.bfloat16)
    # columns, batched over the TILE_H output rows:
    # (TILE_H, W, Ws) @ (TILE_H, Ws, Cout_p) -> (TILE_H, W, Cout_p)
    colb = jnp.broadcast_to(colm_ref[...], (tile_h, wd, ws))
    s = jnp.einsum("hwk,hkc->hwc", colb, s, preferred_element_type=jnp.float32)

    out_ref[0] = (s + y.reshape(tile_h, wd, cout_p)).astype(out_ref.dtype)


# -----------------------------------------------------------------------------
# Wrapper
# -----------------------------------------------------------------------------
def fpn_lateral_block(state_nchw, lateral_nchw, conv_w, bn_gamma, bn_beta,
                      bn_mean, bn_var, eps=1e-5):
    """state_nchw: (N, Cout, Hs, Ws); lateral_nchw: (N, Cin, H, W);
    conv_w: (Cout, Cin, 1, 1).  Returns (N, Cout, H, W) float32."""
    n, cout, hs, ws = state_nchw.shape
    _, cin, h, w = lateral_nchw.shape
    cin_p = _round_up(cin, 128)
    cout_p = _round_up(cout, 128)

    # Fold BatchNorm (inference) into the conv weight and a per-channel shift.
    scale = (bn_gamma / jnp.sqrt(bn_var + eps)).astype(jnp.float32)
    shift = (bn_beta - bn_mean * scale).astype(jnp.float32)
    w_mat = conv_w.reshape(cout, cin).T.astype(jnp.float32) * scale[None, :]
    w_pad = jnp.zeros((cin_p, cout_p), jnp.float32).at[:cin, :cout].set(w_mat)
    shift_pad = jnp.zeros((1, cout_p), jnp.float32).at[0, :cout].set(shift)

    # NCHW -> NHWC, channels padded to lane-dense multiples of 128.
    # TODO(synk): keep activations NHWC end-to-end so these wrapper transposes disappear.
    lat = jnp.transpose(lateral_nchw, (0, 2, 3, 1))
    if cin_p != cin:
        lat = jnp.pad(lat, ((0, 0), (0, 0), (0, 0), (0, cin_p - cin)))
    st = jnp.transpose(state_nchw, (0, 2, 3, 1))
    if cout_p != cout:
        st = jnp.pad(st, ((0, 0), (0, 0), (0, 0), (0, cout_p - cout)))
    st = st.reshape(n, hs, ws * cout_p)

    # Separable bilinear factors (align_corners=False) — a few KB, no kron.
    row_m = _bilinear_matrix(h, hs)
    col_m = _bilinear_matrix(w, ws)

    tile_h = _pick_tile_h(h, w)
    grid = (n, h // tile_h)

    out = pl.pallas_call(
        _fpn_lateral_kernel,
        out_shape=jax.ShapeDtypeStruct((n, h, w, cout_p), jnp.float32),
        grid_spec=pltpu.PrefetchScalarGridSpec(
            num_scalar_prefetch=0,
            grid=grid,
            in_specs=[
                pl.BlockSpec((1, tile_h, w, cin_p), lambda b, i: (b, i, 0, 0)),
                pl.BlockSpec((1, hs, ws * cout_p), lambda b, i: (b, 0, 0)),
                pl.BlockSpec((tile_h, hs), lambda b, i: (i, 0)),
                pl.BlockSpec((w, ws), lambda b, i: (0, 0)),
                pl.BlockSpec((cin_p, cout_p), lambda b, i: (0, 0)),
                pl.BlockSpec((1, cout_p), lambda b, i: (0, 0)),
            ],
            out_specs=pl.BlockSpec((1, tile_h, w, cout_p),
                                   lambda b, i: (b, i, 0, 0)),
        ),
        compiler_params=pltpu.CompilerParams(
            dimension_semantics=("parallel", "parallel"),
            vmem_limit_bytes=64 * 1024 * 1024),
    )(lat.astype(jnp.bfloat16), st.astype(jnp.bfloat16),
      row_m.astype(jnp.bfloat16), col_m.astype(jnp.bfloat16),
      w_pad.astype(jnp.bfloat16), shift_pad)

    out = out[..., :cout]                 # drop channel padding
    return jnp.transpose(out, (0, 3, 1, 2))


# -----------------------------------------------------------------------------
# Pure-JAX f32 reference (same semantics, no Pallas).
# -----------------------------------------------------------------------------
def _reference(state_nchw, lateral_nchw, conv_w, gamma, beta, mean, var, eps=1e-5):
    n, cout, hs_, ws_ = state_nchw.shape
    _, cin, h, w = lateral_nchw.shape
    w_mat = conv_w.reshape(cout, cin).T
    scale = gamma / jnp.sqrt(var + eps)
    shift = beta - mean * scale
    lat = jnp.transpose(lateral_nchw, (0, 2, 3, 1))                    # NHWC
    y = jnp.einsum("nhwc,cd->nhwd", lat, w_mat) * scale + shift
    y = jnp.maximum(y, 0.0)
    row_m = _bilinear_matrix(h, hs_)
    col_m = _bilinear_matrix(w, ws_)
    s = jnp.transpose(state_nchw, (0, 2, 3, 1))                        # (N,Hs,Ws,C)
    s = jnp.einsum("oh,nhwc->nowc", row_m, s)
    s = jnp.einsum("pw,nowc->nopc", col_m, s)
    return jnp.transpose(s + y, (0, 3, 1, 2))


if __name__ == "__main__":
    key = jax.random.PRNGKey(0)
    k1, k2, k3, k4, k5, k6, k7 = jax.random.split(key, 7)

    # Small deterministic problem: N=2, lateral_channels=4, out_channels=8,
    # lateral spatial 16x16, state spatial 8x8.
    N, CIN, COUT = 2, 4, 8
    H, W, HS, WS = 16, 16, 8, 8

    lateral = jax.random.normal(k1, (N, CIN, H, W), dtype=jnp.float32)
    state = jax.random.normal(k2, (N, COUT, HS, WS), dtype=jnp.float32)

    # Conv2dReLU params (conv has no bias because batchnorm is used).
    conv_w = jax.random.normal(k3, (COUT, CIN, 1, 1), dtype=jnp.float32) * 0.1
    gamma = 1.0 + 0.1 * jax.random.normal(k4, (COUT,), dtype=jnp.float32)
    beta = 0.1 * jax.random.normal(k5, (COUT,), dtype=jnp.float32)
    run_mean = 0.05 * jax.random.normal(k6, (COUT,), dtype=jnp.float32)
    run_var = jnp.abs(1.0 + 0.1 * jax.random.normal(k7, (COUT,), dtype=jnp.float32))

    out = fpn_lateral_block(state, lateral, conv_w, gamma, beta, run_mean, run_var)
    out = jax.block_until_ready(out)

    ref = _reference(state, lateral, conv_w, gamma, beta, run_mean, run_var)
    # bf16 matmul inputs with f32 accumulation -> ~1e-2 level agreement vs f32 reference.
    np.testing.assert_allclose(np.asarray(out), np.asarray(ref),
                               rtol=2e-2, atol=5e-2)

    print("KERNEL_OK")
</pallas_src>

<mosaic_0001>
module attributes {stable_mosaic.version = 11 : i64} {
  func.func @_fpn_lateral_kernel(%arg0: i32, %arg1: i32, %arg2: memref<1x16x16x128xbf16, #tpu.memory_space<vmem>>, %arg3: memref<1x8x1024xbf16, #tpu.memory_space<vmem>>, %arg4: memref<16x8xbf16, #tpu.memory_space<vmem>>, %arg5: memref<16x8xbf16, #tpu.memory_space<vmem>>, %arg6: memref<128x128xbf16, #tpu.memory_space<vmem>>, %arg7: memref<1x128xf32, #tpu.memory_space<vmem>>, %arg8: memref<1x16x16x128xf32, #tpu.memory_space<vmem>>) attributes {dimension_semantics = [#tpu.dimension_semantics<parallel>, #tpu.dimension_semantics<parallel>], iteration_bounds = array<i64: 2, 1>, scalar_prefetch = 0 : i64, scratch_operands = 0 : i64, tpu.core_type = #tpu.core_type<tc>, window_params = [{transform_indices = @transform_0, window_bounds = array<i64: 1, 16, 16, 128>}, {transform_indices = @transform_1, window_bounds = array<i64: 1, 8, 1024>}, {transform_indices = @transform_2, window_bounds = array<i64: 16, 8>}, {pipeline_mode = #tpu.pipeline_mode<synchronous>, transform_indices = @transform_3, window_bounds = array<i64: 16, 8>}, {pipeline_mode = #tpu.pipeline_mode<synchronous>, transform_indices = @transform_4, window_bounds = array<i64: 128, 128>}, {pipeline_mode = #tpu.pipeline_mode<synchronous>, transform_indices = @transform_5, window_bounds = array<i64: 1, 128>}, {transform_indices = @transform_6, window_bounds = array<i64: 1, 16, 16, 128>}]} {
    %c0 = arith.constant 0 : index
    %c0_0 = arith.constant 0 : index
    %c0_1 = arith.constant 0 : index
    %c0_2 = arith.constant 0 : index
    %0 = vector.load %arg2[%c0, %c0_0, %c0_1, %c0_2] : memref<1x16x16x128xbf16, #tpu.memory_space<vmem>>, vector<1x16x16x128xbf16>
    %1 = vector.shape_cast %0 : vector<1x16x16x128xbf16> to vector<16x16x128xbf16>
    %2 = vector.shape_cast %1 : vector<16x16x128xbf16> to vector<256x128xbf16>
    %c0_3 = arith.constant 0 : index
    %c0_4 = arith.constant 0 : index
    %3 = vector.load %arg6[%c0_3, %c0_4] : memref<128x128xbf16, #tpu.memory_space<vmem>>, vector<128x128xbf16>
    %cst = arith.constant dense<0.000000e+00> : vector<256x128xf32>
    %4 = tpu.matmul %2, %3, %cst {dimension_numbers = #tpu.dot_dimension_numbers<[1], [0], [0], [1], [0, 0, 1, 1], [], []>} : vector<256x128xbf16>, vector<128x128xbf16>, vector<256x128xf32> -> vector<256x128xf32>
    %c0_5 = arith.constant 0 : index
    %c0_6 = arith.constant 0 : index
    %5 = vector.load %arg7[%c0_5, %c0_6] : memref<1x128xf32, #tpu.memory_space<vmem>>, vector<1x128xf32>
    %6 = vector.broadcast %5 : vector<1x128xf32> to vector<256x128xf32>
    %7 = arith.addf %4, %6 : vector<256x128xf32>
    %cst_7 = arith.constant 0.000000e+00 : f32
    %8 = vector.broadcast %cst_7 : f32 to vector<256x128xf32>
    %9 = arith.maximumf %7, %8 : vector<256x128xf32>
    %c0_8 = arith.constant 0 : index
    %c0_9 = arith.constant 0 : index
    %10 = vector.load %arg4[%c0_8, %c0_9] : memref<16x8xbf16, #tpu.memory_space<vmem>>, vector<16x8xbf16>
    %c0_10 = arith.constant 0 : index
    %c0_11 = arith.constant 0 : index
    %c0_12 = arith.constant 0 : index
    %11 = vector.load %arg3[%c0_10, %c0_11, %c0_12] : memref<1x8x1024xbf16, #tpu.memory_space<vmem>>, vector<1x8x1024xbf16>
    %12 = vector.shape_cast %11 : vector<1x8x1024xbf16> to vector<8x1024xbf16>
    %cst_13 = arith.constant dense<0.000000e+00> : vector<16x1024xf32>
    %13 = tpu.matmul %10, %12, %cst_13 {dimension_numbers = #tpu.dot_dimension_numbers<[1], [0], [0], [1], [0, 0, 1, 1], [], []>} : vector<16x8xbf16>, vector<8x1024xbf16>, vector<16x1024xf32> -> vector<16x1024xf32>
    %14 = vector.shape_cast %13 : vector<16x1024xf32> to vector<16x8x128xf32>
    %15 = arith.truncf %14 : vector<16x8x128xf32> to vector<16x8x128xbf16>
    %c0_14 = arith.constant 0 : index
    %c0_15 = arith.constant 0 : index
    %16 = vector.load %arg5[%c0_14, %c0_15] : memref<16x8xbf16, #tpu.memory_space<vmem>>, vector<16x8xbf16>
    %17 = vector.shape_cast %16 : vector<16x8xbf16> to vector<1x16x8xbf16>
    %18 = vector.broadcast %17 : vector<1x16x8xbf16> to vector<16x16x8xbf16>
    "tpu.trace_start"() <{level = 10 : i32, message = "hwk,hkc->hwc"}> : () -> ()
    %cst_16 = arith.constant dense<0.000000e+00> : vector<16x16x128xf32>
    %19 = tpu.matmul %18, %15, %cst_16 {dimension_numbers = #tpu.dot_dimension_numbers<[2], [1], [1], [2], [0, 0, 0, 1, 1, 2], [0], [0]>} : vector<16x16x8xbf16>, vector<16x8x128xbf16>, vector<16x16x128xf32> -> vector<16x16x128xf32>
    "tpu.trace_stop"() : () -> ()
    %20 = vector.shape_cast %9 : vector<256x128xf32> to vector<16x16x128xf32>
    %21 = arith.addf %19, %20 : vector<16x16x128xf32>
    %c0_17 = arith.constant 0 : index
    %c0_18 = arith.constant 0 : index
    %c0_19 = arith.constant 0 : index
    %c0_20 = arith.constant 0 : index
    %22 = vector.load %arg8[%c0_17, %c0_18, %c0_19, %c0_20] : memref<1x16x16x128xf32, #tpu.memory_space<vmem>>, vector<1x16x16x128xf32>
    %23 = vector.shape_cast %22 : vector<1x16x16x128xf32> to vector<16x16x128xf32>
    %24 = vector.shape_cast %21 : vector<16x16x128xf32> to vector<1x16x16x128xf32>
    tpu.vector_store %arg8[%c0_17, %c0_18, %c0_19, %c0_20], %24 {strides = array<i32>} : memref<1x16x16x128xf32, #tpu.memory_space<vmem>>, vector<1x16x16x128xf32>,
    return
  }
  func.func @transform_0(%arg0: i32, %arg1: i32) -> (i32, i32, i32, i32) {
    %c0_i32 = arith.constant 0 : i32
    %c0_i32_0 = arith.constant 0 : i32
    %c0_i32_1 = arith.constant 0 : i32
    return %arg0, %arg1, %c0_i32, %c0_i32_0 : i32, i32, i32, i32
  }
  func.func @transform_1(%arg0: i32, %arg1: i32) -> (i32, i32, i32) {
    %c0_i32 = arith.constant 0 : i32
    %c0_i32_0 = arith.constant 0 : i32
    %c0_i32_1 = arith.constant 0 : i32
    return %arg0, %c0_i32, %c0_i32_0 : i32, i32, i32
  }
  func.func @transform_2(%arg0: i32, %arg1: i32) -> (i32, i32) {
    %c0_i32 = arith.constant 0 : i32
    %c0_i32_0 = arith.constant 0 : i32
    return %arg1, %c0_i32 : i32, i32
  }
  func.func @transform_3(%arg0: i32, %arg1: i32) -> (i32, i32) {
    %c0_i32 = arith.constant 0 : i32
    %c0_i32_0 = arith.constant 0 : i32
    %c0_i32_1 = arith.constant 0 : i32
    return %c0_i32, %c0_i32_0 : i32, i32
  }
  func.func @transform_4(%arg0: i32, %arg1: i32) -> (i32, i32) {
    %c0_i32 = arith.constant 0 : i32
    %c0_i32_0 = arith.constant 0 : i32
    %c0_i32_1 = arith.constant 0 : i32
    return %c0_i32, %c0_i32_0 : i32, i32
  }
  func.func @transform_5(%arg0: i32, %arg1: i32) -> (i32, i32) {
    %c0_i32 = arith.constant 0 : i32
    %c0_i32_0 = arith.constant 0 : i32
    %c0_i32_1 = arith.constant 0 : i32
    return %c0_i32, %c0_i32_0 : i32, i32
  }
  func.func @transform_6(%arg0: i32, %arg1: i32) -> (i32, i32, i32, i32) {
    %c0_i32 = arith.constant 0 : i32
    %c0_i32_0 = arith.constant 0 : i32
    %c0_i32_1 = arith.constant 0 : i32
    return %arg0, %arg1, %c0_i32, %c0_i32_0 : i32, i32, i32, i32
  }
}

</mosaic_0001>

<llo_original>
// kernel: tpu_custom_call.1
$region0: #{tpu_custom_call.1}
  #allocation0 [shape = 'u32[]', space=smem, size = 0x4, offset = 0x4, fixed_abs, tag = 'smem constant byte address 0x4 - core index']
  #allocation1 [shape = 'u32[144,128]{1,0:T(1,128)}', space=vmem, size = 0x12000, scoped, tag = 'internal scratch']
  %s0 = inlined_call_operand.hbm [shape: bf16[2,16,16,128], index: 0, kind: input, shape index: {}]
  %s1 = inlined_call_operand.hbm [shape: bf16[2,8,1024], index: 1, kind: input, shape index: {}]
  %s2 = inlined_call_operand.vmem [shape: bf16[16,8], index: 2, kind: input, shape index: {}]
  %s3 = inlined_call_operand.vmem [shape: bf16[16,8], index: 3, kind: input, shape index: {}]
  %s4 = inlined_call_operand.hbm [shape: bf16[128,128], index: 4, kind: input, shape index: {}]
  %s5 = inlined_call_operand.vmem [shape: f32[1,128], index: 5, kind: input, shape index: {}]
  %s6 = inlined_call_operand.hbm [shape: f32[2,16,16,128], index: 6, kind: output, shape index: {}]
  %s7 = sld [smem:[#allocation0]]
  $region69: #{tpu_custom_call.1} parent=0
    _
  %s9 = ssub.s32 1, %s7
  %s10 = scalar_select 0, %s9, %s7
  $region1: #{tpu_custom_call.1} parent=0
    #allocation2 [shape = 'u8[131072]{0}', space=vmem, size = 0x20000, scoped, tag = 'input window, operand 0']
    #allocation3 [shape = 's32[2]{0}', space=sflag, size = 0x8, scoped, tag = 'scoped memory for tpu_custom_call.1']
    #allocation4 [shape = 's32[2]{0}', space=sflag, size = 0x8, scoped, tag = 'scoped memory for tpu_custom_call.1']
    #allocation5 [shape = 'u8[32768]{0}', space=vmem, size = 0x8000, scoped, tag = 'input window, operand 1']
    #allocation6 [shape = 's32[2]{0}', space=sflag, size = 0x8, scoped, tag = 'scoped memory for tpu_custom_call.1']
    #allocation7 [shape = 'u8[32768]{0}', space=vmem, size = 0x8000, scoped, tag = 'input window, operand 4, single buffered']
    #allocation8 [shape = 'u8[262144]{0}', space=vmem, size = 0x40000, scoped, tag = 'output window, operand 0']
    %11 = vsyncpa [#allocation3], 0
    %s12 = scalar_lea.sflag [#allocation3], 1
    %13 = vsyncpa %s12, 0
    %14 = vsyncpa [#allocation6], 0
    %s15 = scalar_lea.sflag [#allocation6], 1
    %16 = vsyncpa %s15, 0
    %17 = vsyncpa [#allocation4], 0
    %s18 = scalar_lea.sflag [#allocation4], 1
    %19 = vsyncpa %s18, 0
    loop: start=0, step=1, limit=4
    $region2: #{tpu_custom_call.1} parent=1 // loop_pre_header
      _
    $region3: #{tpu_custom_call.1} parent=1 // loop_header
      %s21 = sphi 0, %s25
      %p22 = scmp.ge.s32.totalorder %s21, 4
      %s28 = sphi 0, %s40
      %s29 = sphi 0, %s36
      %s30 = sphi 0, %s28
      %s31 = sphi 0, %s29
      %s32 = sphi 0, %s30
      %s33 = sphi 0, %s31
      %s45 = sphi 0, %s47
      %s48 = sphi 0, %s45
      %s49 = sphi 0, %s48
      %s65 = sphi 0, %s49
      %s71 = sphi 0, %s73
      %s74 = sphi 0, %s71
      %s75 = sphi 0, %s74
      %s91 = sphi 0, %s75
      %s97 = sphi 0, %s99
      %s100 = sphi 0, %s97
      %s101 = sphi 0, %s100
      %s117 = sphi 0, %s101
      %s121 = sphi 0, %s121
      %s123 = sphi 0, %s121
      %s124 = sphi 0, %s123
      %s138 = sphi 0, %s124
      %s142 = sphi 0, %s142
      %s144 = sphi 0, %s142
      %s145 = sphi 0, %s144
      %s159 = sphi 0, %s145
      %s163 = sphi 0, %s163
      %s165 = sphi 0, %s163
      %s166 = sphi 0, %s165
      %s180 = sphi 0, %s166
      %s188 = sphi 0, %s190
      %s191 = sphi 0, %s188
      %s192 = sphi 0, %s191
      %s208 = sphi 0, %s192
    $region4: #{tpu_custom_call.1} parent=1 // loop_header_branch
      %24 = sbr.rel (%p22) target = $region8
    $region5: #{tpu_custom_call.1} parent=1 // loop_body
      %s26 = ssub.s32 %s21, 1
      %s27 = ssub.s32 %s21, 2
      %s34 = sadd.s32 1, %s29
      %p35 = scmp.ge.s32.totalorder %s34, 1
      %s36 = scalar_select %p35, 0, %s34
      %s37 = sadd.s32 1, %s28
      %s38 = scalar_select %p35, %s37, %s28
      %p39 = scmp.ge.s32.totalorder %s38, 2
      %s40 = scalar_select %p39, 0, %s38
      %s41 = ssub.s32 %s28, %s40
      %s42 = ssub.s32 %s29, %s36
      %s43 = sor.u32 %s41, %s42
      %p44 = scmp.eq.s32.totalorder %s43, 0
      %s46 = sadd.s32 %s45, 1
      %s47 = scalar_select %p44, %s45, %s46
      %p50 = pneg %p44
      %p51 = scmp.eq.s32.totalorder %s21, 1
      %p52 = por %p50, %p51
      %p53 = scmp.ne.s32.totalorder %s45, %s48
      %p54 = scmp.eq.s32.totalorder %s21, 0
      %p55 = por %p53, %p54
      %p56 = scmp.ne.s32.totalorder %s45, %s48
      %p57 = scmp.eq.s32.totalorder %s26, 1
      %p58 = por %p56, %p57
      %p59 = scmp.ne.s32.totalorder %s48, %s49
      %p60 = scmp.eq.s32.totalorder %s26, 0
      %p61 = por %p59, %p60
      %p62 = scmp.ne.s32.totalorder %s48, %s49
      %p63 = scmp.eq.s32.totalorder %s27, 1
      %p64 = por %p62, %p63
      %p66 = scmp.ne.s32.totalorder %s49, %s65
      %p67 = scmp.eq.s32.totalorder %s27, 0
      %p68 = por %p66, %p67
      %s69 = ssub.s32 %s28, %s40
      %p70 = scmp.eq.s32.totalorder %s69, 0
      %s72 = sadd.s32 %s71, 1
      %s73 = scalar_select %p70, %s71, %s72
      %p76 = pneg %p70
      %p77 = scmp.eq.s32.totalorder %s21, 1
      %p78 = por %p76, %p77
      %p79 = scmp.ne.s32.totalorder %s71, %s74
      %p80 = scmp.eq.s32.totalorder %s21, 0
      %p81 = por %p79, %p80
      %p82 = scmp.ne.s32.totalorder %s71, %s74
      %p83 = scmp.eq.s32.totalorder %s26, 1
      %p84 = por %p82, %p83
      %p85 = scmp.ne.s32.totalorder %s74, %s75
      %p86 = scmp.eq.s32.totalorder %s26, 0
      %p87 = por %p85, %p86
      %p88 = scmp.ne.s32.totalorder %s74, %s75
      %p89 = scmp.eq.s32.totalorder %s27, 1
      %p90 = por %p88, %p89
      %p92 = scmp.ne.s32.totalorder %s75, %s91
      %p93 = scmp.eq.s32.totalorder %s27, 0
      %p94 = por %p92, %p93
      %s95 = ssub.s32 %s29, %s36
      %p96 = scmp.eq.s32.totalorder %s95, 0
      %s98 = sadd.s32 %s97, 1
      %s99 = scalar_select %p96, %s97, %s98
      %p102 = pneg %p96
      %p103 = scmp.eq.s32.totalorder %s21, 1
      %p104 = por %p102, %p103
      %p105 = scmp.ne.s32.totalorder %s97, %s100
      %p106 = scmp.eq.s32.totalorder %s21, 0
      %p107 = por %p105, %p106
      %p108 = scmp.ne.s32.totalorder %s97, %s100
      %p109 = scmp.eq.s32.totalorder %s26, 1
      %p110 = por %p108, %p109
      %p111 = scmp.ne.s32.totalorder %s100, %s101
      %p112 = scmp.eq.s32.totalorder %s26, 0
      %p113 = por %p111, %p112
      %p114 = scmp.ne.s32.totalorder %s100, %s101
      %p115 = scmp.eq.s32.totalorder %s27, 1
      %p116 = por %p114, %p115
      %p118 = scmp.ne.s32.totalorder %s101, %s117
      %p119 = scmp.eq.s32.totalorder %s27, 0
      %p120 = por %p118, %p119
      %s122 = sadd.s32 %s121, 1
      %p125 = scmp.eq.s32.totalorder %s21, 1
      %p126 = scmp.ne.s32.totalorder %s121, %s123
      %p127 = scmp.eq.s32.totalorder %s21, 0
      %p128 = por %p126, %p127
      %p129 = scmp.ne.s32.totalorder %s121, %s123
      %p130 = scmp.eq.s32.totalorder %s26, 1
      %p131 = por %p129, %p130
      %p132 = scmp.ne.s32.totalorder %s123, %s124
      %p133 = scmp.eq.s32.totalorder %s26, 0
      %p134 = por %p132, %p133
      %p135 = scmp.ne.s32.totalorder %s123, %s124
      %p136 = scmp.eq.s32.totalorder %s27, 1
      %p137 = por %p135, %p136
      %p139 = scmp.ne.s32.totalorder %s124, %s138
      %p140 = scmp.eq.s32.totalorder %s27, 0
      %p141 = por %p139, %p140
      %s143 = sadd.s32 %s142, 1
      %p146 = scmp.eq.s32.totalorder %s21, 1
      %p147 = scmp.ne.s32.totalorder %s142, %s144
      %p148 = scmp.eq.s32.totalorder %s21, 0
      %p149 = por %p147, %p148
      %p150 = scmp.ne.s32.totalorder %s142, %s144
      %p151 = scmp.eq.s32.totalorder %s26, 1
      %p152 = por %p150, %p151
      %p153 = scmp.ne.s32.totalorder %s144, %s145
      %p154 = scmp.eq.s32.totalorder %s26, 0
      %p155 = por %p153, %p154
      %p156 = scmp.ne.s32.totalorder %s144, %s145
      %p157 = scmp.eq.s32.totalorder %s27, 1
      %p158 = por %p156, %p157
      %p160 = scmp.ne.s32.totalorder %s145, %s159
      %p161 = scmp.eq.s32.totalorder %s27, 0
      %p162 = por %p160, %p161
      %s164 = sadd.s32 %s163, 1
      %p167 = scmp.eq.s32.totalorder %s21, 1
      %p168 = scmp.ne.s32.totalorder %s163, %s165
      %p169 = scmp.eq.s32.totalorder %s21, 0
      %p170 = por %p168, %p169
      %p171 = scmp.ne.s32.totalorder %s163, %s165
      %p172 = scmp.eq.s32.totalorder %s26, 1
      %p173 = por %p171, %p172
      %p174 = scmp.ne.s32.totalorder %s165, %s166
      %p175 = scmp.eq.s32.totalorder %s26, 0
      %p176 = por %p174, %p175
      %p177 = scmp.ne.s32.totalorder %s165, %s166
      %p178 = scmp.eq.s32.totalorder %s27, 1
      %p179 = por %p177, %p178
      %p181 = scmp.ne.s32.totalorder %s166, %s180
      %p182 = scmp.eq.s32.totalorder %s27, 0
      %p183 = por %p181, %p182
      %s184 = ssub.s32 %s28, %s40
      %s185 = ssub.s32 %s29, %s36
      %s186 = sor.u32 %s184, %s185
      %p187 = scmp.eq.s32.totalorder %s186, 0
      %s189 = sadd.s32 %s188, 1
      %s190 = scalar_select %p187, %s188, %s189
      %p193 = pneg %p187
      %p194 = scmp.eq.s32.totalorder %s21, 1
      %p195 = por %p193, %p194
      %p196 = scmp.ne.s32.totalorder %s188, %s191
      %p197 = scmp.eq.s32.totalorder %s21, 0
      %p198 = por %p196, %p197
      %p199 = scmp.ne.s32.totalorder %s188, %s191
      %p200 = scmp.eq.s32.totalorder %s26, 1
      %p201 = por %p199, %p200
      %p202 = scmp.ne.s32.totalorder %s191, %s192
      %p203 = scmp.eq.s32.totalorder %s26, 0
      %p204 = por %p202, %p203
      %p205 = scmp.ne.s32.totalorder %s191, %s192
      %p206 = scmp.eq.s32.totalorder %s27, 1
      %p207 = por %p205, %p206
      %p209 = scmp.ne.s32.totalorder %s192, %s208
      %p210 = scmp.eq.s32.totalorder %s27, 0
      %p211 = por %p209, %p210
      %p212 = scmp.le.s32.totalorder 1, %s21
      %p213 = scmp.lt.s32.totalorder %s21, 3
      %p214 = pnand %p212, %p213
      %p215 = pneg %p214
      // Predicated region
      $region9: #{tpu_custom_call.1} parent=5 // pred_check
        _
      $region10: #{tpu_custom_call.1} parent=5 // pred_check_branch
        %217 = sbr.rel (%p214) target = $region12
      $region11: #{tpu_custom_call.1} parent=5 // pred_region
        %s218 = ssub.s32 %s21, 1
        // Predicated region
        $region13: #{tpu_custom_call.1} parent=11 // pred_check
          %p219 = pneg %p113
        $region14: #{tpu_custom_call.1} parent=11 // pred_check_branch
          %221 = sbr.rel (%p219) target = $region16
        $region15: #{tpu_custom_call.1} parent=11 // pred_region
          %s222 = smul.u32 2, %s31
          %p223 = scmp.lt.s32.totalorder %s222, 1
          %s224 = scalar_select %p223, %s222, 1
          %s225 = smul.addr %s224, 4
          %s226 = scalar_lea.vmem %s2, %s225
          %s227 = smul.u32 2, %s31
        $region16: #{tpu_custom_call.1} parent=11 // pred_fallthru
          _
        // Predicated region
        $region17: #{tpu_custom_call.1} parent=11 // pred_check
          %p228 = pneg %p134
        $region18: #{tpu_custom_call.1} parent=11 // pred_check_branch
          %230 = sbr.rel (%p228) target = $region20
        $region19: #{tpu_custom_call.1} parent=11 // pred_region
          _
        $region20: #{tpu_custom_call.1} parent=11 // pred_fallthru
          _
        // Predicated region
        $region21: #{tpu_custom_call.1} parent=11 // pred_check
          %p231 = pneg %p155
        $region22: #{tpu_custom_call.1} parent=11 // pred_check_branch
          %233 = sbr.rel (%p231) target = $region24
        $region23: #{tpu_custom_call.1} parent=11 // pred_region
          %s235 = ssub.s32 1024, 1024
          %236 = vsyncadd [#allocation6], %s235
          %s237 = sshll.u32 [#allocation7], 4
          %s238 = int_to_ptr.vmem [resolvable:$true] %s237
          %243 = dma.hbm_to_vmem [thread:$0]  %s4, 1024, %s238, [#allocation6], 64, 64, 4
        $region24: #{tpu_custom_call.1} parent=11 // pred_fallthru
          _
        // Predicated region
        $region25: #{tpu_custom_call.1} parent=11 // pred_check
          %p244 = pneg %p176
        $region26: #{tpu_custom_call.1} parent=11 // pred_check_branch
          %246 = sbr.rel (%p244) target = $region28
        $region27: #{tpu_custom_call.1} parent=11 // pred_region
          _
        $region28: #{tpu_custom_call.1} parent=11 // pred_fallthru
          _
      $region12: #{tpu_custom_call.1} parent=5 // pred_fallthru
        _
      %p247 = scmp.lt.s32.totalorder %s21, 2
      // Predicated region
      $region29: #{tpu_custom_call.1} parent=5 // pred_check
        %p248 = pneg %p247
      $region30: #{tpu_custom_call.1} parent=5 // pred_check_branch
        %250 = sbr.rel (%p248) target = $region32
      $region31: #{tpu_custom_call.1} parent=5 // pred_region
        // Predicated region
        $region33: #{tpu_custom_call.1} parent=31 // pred_check
          %p251 = pneg %p55
        $region34: #{tpu_custom_call.1} parent=31 // pred_check_branch
          %253 = sbr.rel (%p251) target = $region36
        $region35: #{tpu_custom_call.1} parent=31 // pred_region
          %s254 = sand.u32 %s45, 1
          %s255 = scalar_lea.sflag [#allocation3], %s254
          %s256 = sand.u32 %s45, 1
          %s257 = smul.addr %s256, 128
          %s258 = scalar_lea.vmem [#allocation2], %s257
          %s259 = smul.u32 16, %s29
          %s261 = ssub.s32 2048, 2048
          %262 = vsyncadd %s255, %s261
          %s263 = smul.addr %s259, 2
          %s264 = smul.addr %s28, 32
          %s265 = sadd.s32 %s263, %s264
          %s266 = smul.addr %s265, 64
          %s267 = scalar_lea.hbm %s0, %s266
          %s268 = sshll.u32 %s258, 4
          %s269 = int_to_ptr.vmem [resolvable:$true] %s268
          %274 = dma.hbm_to_vmem [thread:$0]  %s267, 2048, %s269, %s255, 64, 64, 4
        $region36: #{tpu_custom_call.1} parent=31 // pred_fallthru
          _
        // Predicated region
        $region37: #{tpu_custom_call.1} parent=31 // pred_check
          %p275 = pneg %p81
        $region38: #{tpu_custom_call.1} parent=31 // pred_check_branch
          %277 = sbr.rel (%p275) target = $region40
        $region39: #{tpu_custom_call.1} parent=31 // pred_region
          %s278 = sand.u32 %s21, 1
          %s279 = scalar_lea.sflag [#allocation6], %s278
          %s280 = sand.u32 %s71, 1
          %s281 = smul.addr %s280, 32
          %s282 = scalar_lea.vmem [#allocation5], %s281
          %s284 = ssub.s32 512, 512
          %285 = vsyncadd %s279, %s284
          %s286 = smul.addr %s28, 8
          %s287 = smul.addr %s286, 64
          %s288 = scalar_lea.hbm %s1, %s287
          %s290 = sshll.u32 %s282, 4
          %s291 = int_to_ptr.vmem [resolvable:$true] %s290
          %293 = dma.hbm_to_vmem [thread:$0]  %s288, 512, %s291, %s279
        $region40: #{tpu_custom_call.1} parent=31 // pred_fallthru
          _
      $region32: #{tpu_custom_call.1} parent=5 // pred_fallthru
        _
      %p294 = scmp.le.s32.totalorder 1, %s21
      %p295 = scmp.lt.s32.totalorder %s21, 3
      %p296 = pnand %p294, %p295
      %p297 = pneg %p296
      // Predicated region
      $region41: #{tpu_custom_call.1} parent=5 // pred_check
        _
      $region42: #{tpu_custom_call.1} parent=5 // pred_check_branch
        %299 = sbr.rel (%p296) target = $region44
      $region43: #{tpu_custom_call.1} parent=5 // pred_region
        %s300 = ssub.s32 %s21, 1
        %s301 = sand.u32 %s48, 1
        %s302 = scalar_lea.sflag [#allocation3], %s301
        %s303 = sand.u32 %s48, 1
        %s304 = smul.addr %s303, 128
        %s305 = scalar_lea.vmem [#allocation2], %s304
        // Predicated region
        $region45: #{tpu_custom_call.1} parent=43 // pred_check
          %p306 = pneg %p61
        $region46: #{tpu_custom_call.1} parent=43 // pred_check_branch
          %308 = sbr.rel (%p306) target = $region48
        $region47: #{tpu_custom_call.1} parent=43 // pred_region
          %309 = dma.done %s302, 2048
        $region48: #{tpu_custom_call.1} parent=43 // pred_fallthru
          _
        %s310 = sand.u32 %s26, 1
        %s311 = scalar_lea.sflag [#allocation6], %s310
        %s312 = sand.u32 %s74, 1
        %s313 = smul.addr %s312, 32
        %s314 = scalar_lea.vmem [#allocation5], %s313
        // Predicated region
        $region49: #{tpu_custom_call.1} parent=43 // pred_check
          %p315 = pneg %p87
        $region50: #{tpu_custom_call.1} parent=43 // pred_check_branch
          %317 = sbr.rel (%p315) target = $region52
        $region51: #{tpu_custom_call.1} parent=43 // pred_region
          %318 = dma.done %s311, 512
        $region52: #{tpu_custom_call.1} parent=43 // pred_fallthru
          _
        // Predicated region
        $region53: #{tpu_custom_call.1} parent=43 // pred_check
          %p319 = pneg %p155
        $region54: #{tpu_custom_call.1} parent=43 // pred_check_branch
          %321 = sbr.rel (%p319) target = $region56
        $region55: #{tpu_custom_call.1} parent=43 // pred_region
          %322 = dma.done [#allocation6], 1024
        $region56: #{tpu_custom_call.1} parent=43 // pred_fallthru
          _
        %s323 = sand.u32 %s48, 1
        %s324 = scalar_lea.sflag [#allocation3], %s323
        %s325 = sand.u32 %s48, 1
        %s326 = smul.addr %s325, 128
        %s327 = scalar_lea.vmem [#allocation2], %s326
        %p328 = pneg %p61
        %p329 = pneg %p58
        %s330 = sand.u32 %s26, 1
        %s331 = scalar_lea.sflag [#allocation6], %s330
        %s332 = sand.u32 %s74, 1
        %s333 = smul.addr %s332, 32
        %s334 = scalar_lea.vmem [#allocation5], %s333
        %p335 = pneg %p87
        %p336 = pneg %p84
        %s337 = smul.u32 2, %s31
        %p338 = scmp.lt.s32.totalorder %s337, 1
        %s339 = scalar_select %p338, %s337, 1
        %s340 = smul.addr %s339, 4
        %s341 = scalar_lea.vmem %s2, %s340
        %p342 = pneg %p113
        %p343 = pneg %p110
        %p344 = pneg %p134
        %p345 = pneg %p131
        %p346 = pneg %p155
        %p347 = pneg %p152
        %p348 = pneg %p176
        %p349 = pneg %p173
        %p350 = pneg %p204
        %p351 = pneg %p201
        %s352 = sand.u32 %s191, 1
        %s353 = scalar_lea.sflag [#allocation4], %s352
        %s354 = sand.u32 %s191, 1
        %s355 = smul.addr %s354, 256
        %s356 = scalar_lea.vmem [#allocation8], %s355
        %s357 = smul.u32 16, %s31
        %s358 = smul.u32 2, %s31
        %p359 = scmp.lt.s32.totalorder %s358, 1
        %s360 = scalar_select %p359, %s358, 1
        %s361 = smul.addr %s360, 4
        %s362 = scalar_lea.vmem %s2, %s361
        %s363 = smul.u32 2, %s31
        %s364 = smul.u32 16, %s31
        %v366 = vld [vmem:[%s305] sm:$0xf]
        %v367 = vld [vmem:[%s305 + $0x4] sm:$0xf]
        %v368 = vld [vmem:[%s305 + $0x8] sm:$0xf]
        %v369 = vld [vmem:[%s305 + $0xc] sm:$0xf]
        %v370 = vld [vmem:[%s305 + $0x10] sm:$0xf]
        %v371 = vld [vmem:[%s305 + $0x14] sm:$0xf]
        %v372 = vld [vmem:[%s305 + $0x18] sm:$0xf]
        %v373 = vld [vmem:[%s305 + $0x1c] sm:$0xf]
        %v374 = vld [vmem:[%s305 + $0x20] sm:$0xf]
        %v375 = vld [vmem:[%s305 + $0x24] sm:$0xf]
        %v376 = vld [vmem:[%s305 + $0x28] sm:$0xf]
        %v377 = vld [vmem:[%s305 + $0x2c] sm:$0xf]
        %v378 = vld [vmem:[%s305 + $0x30] sm:$0xf]
        %v379 = vld [vmem:[%s305 + $0x34] sm:$0xf]
        %v380 = vld [vmem:[%s305 + $0x38] sm:$0xf]
        %v381 = vld [vmem:[%s305 + $0x3c] sm:$0xf]
        %v382 = vld [vmem:[%s305 + $0x40] sm:$0xf]
        %v383 = vld [vmem:[%s305 + $0x44] sm:$0xf]
        %v384 = vld [vmem:[%s305 + $0x48] sm:$0xf]
        %v385 = vld [vmem:[%s305 + $0x4c] sm:$0xf]
        %v386 = vld [vmem:[%s305 + $0x50] sm:$0xf]
        %v387 = vld [vmem:[%s305 + $0x54] sm:$0xf]
        %v388 = vld [vmem:[%s305 + $0x58] sm:$0xf]
        %v389 = vld [vmem:[%s305 + $0x5c] sm:$0xf]
        %v390 = vld [vmem:[%s305 + $0x60] sm:$0xf]
        %v391 = vld [vmem:[%s305 + $0x64] sm:$0xf]
        %v392 = vld [vmem:[%s305 + $0x68] sm:$0xf]
        %v393 = vld [vmem:[%s305 + $0x6c] sm:$0xf]
        %v394 = vld [vmem:[%s305 + $0x70] sm:$0xf]
        %v395 = vld [vmem:[%s305 + $0x74] sm:$0xf]
        %v396 = vld [vmem:[%s305 + $0x78] sm:$0xf]
        %v397 = vld [vmem:[%s305 + $0x7c] sm:$0xf]
        %v398 = vld [vmem:[#allocation7] sm:$0xf]
        %v399 = vld [vmem:[#allocation7 + $0x4] sm:$0xf]
        %v400 = vld [vmem:[#allocation7 + $0x8] sm:$0xf]
        %v401 = vld [vmem:[#allocation7 + $0xc] sm:$0xf]
        %v402 = vld [vmem:[#allocation7 + $0x10] sm:$0xf]
        %v403 = vld [vmem:[#allocation7 + $0x14] sm:$0xf]
        %v404 = vld [vmem:[#allocation7 + $0x18] sm:$0xf]
        %v405 = vld [vmem:[#allocation7 + $0x1c] sm:$0xf]
        %v406 = vld [vmem:[#allocation7 + $0x20] sm:$0xf]
        %v407 = vld [vmem:[#allocation7 + $0x24] sm:$0xf]
        %v408 = vld [vmem:[#allocation7 + $0x28] sm:$0xf]
        %v409 = vld [vmem:[#allocation7 + $0x2c] sm:$0xf]
        %v410 = vld [vmem:[#allocation7 + $0x30] sm:$0xf]
        %v411 = vld [vmem:[#allocation7 + $0x34] sm:$0xf]
        %v412 = vld [vmem:[#allocation7 + $0x38] sm:$0xf]
        %v413 = vld [vmem:[#allocation7 + $0x3c] sm:$0xf]
        %v414 = vld [vmem:[%s5] sm:$0x1]
        %v416 = vlaneseq
        %v417 = vshrl.u32 %v416, 7
        %v418 = vsub.s32 0, %v417
        %v419 = vrot.slane %v414, %v418
        %v453 = vunpack.c.l.b16 %v366
        %v454 = vunpack.c.l.b16 %v367
        %v455 = vunpack.c.l.b16 %v368
        %v456 = vunpack.c.l.b16 %v369
        %v457 = vunpack.c.l.b16 %v370
        %v458 = vunpack.c.l.b16 %v371
        %v459 = vunpack.c.l.b16 %v372
        %v460 = vunpack.c.l.b16 %v373
        %v461 = vunpack.c.l.b16 %v374
        %v462 = vunpack.c.l.b16 %v375
        %v463 = vunpack.c.l.b16 %v376
        %v464 = vunpack.c.l.b16 %v377
        %v465 = vunpack.c.l.b16 %v378
        %v466 = vunpack.c.l.b16 %v379
        %v467 = vunpack.c.l.b16 %v380
        %v468 = vunpack.c.l.b16 %v381
        %v469 = vunpack.c.l.b16 %v382
        %v470 = vunpack.c.l.b16 %v383
        %v471 = vunpack.c.l.b16 %v384
        %v472 = vunpack.c.l.b16 %v385
        %v473 = vunpack.c.l.b16 %v386
        %v474 = vunpack.c.l.b16 %v387
        %v475 = vunpack.c.l.b16 %v388
        %v476 = vunpack.c.l.b16 %v389
        %v477 = vunpack.c.l.b16 %v390
        %v478 = vunpack.c.l.b16 %v391
        %v479 = vunpack.c.l.b16 %v392
        %v480 = vunpack.c.l.b16 %v393
        %v481 = vunpack.c.l.b16 %v394
        %v482 = vunpack.c.l.b16 %v395
        %v483 = vunpack.c.l.b16 %v396
        %v484 = vunpack.c.l.b16 %v397
        %v485 = vpack.c.b16 %v454, %v453
        %v486 = vpack.c.b16 %v456, %v455
        %v487 = vpack.c.b16 %v458, %v457
        %v488 = vpack.c.b16 %v460, %v459
        %v489 = vpack.c.b16 %v462, %v461
        %v490 = vpack.c.b16 %v464, %v463
        %v491 = vpack.c.b16 %v466, %v465
        %v492 = vpack.c.b16 %v468, %v467
        %v493 = vpack.c.b16 %v470, %v469
        %v494 = vpack.c.b16 %v472, %v471
        %v495 = vpack.c.b16 %v474, %v473
        %v496 = vpack.c.b16 %v476, %v475
        %v497 = vpack.c.b16 %v478, %v477
        %v498 = vpack.c.b16 %v480, %v479
        %v499 = vpack.c.b16 %v482, %v481
        %v500 = vpack.c.b16 %v484, %v483
        %v533 = vunpack.c.l.b16 %v398
        %v534 = vunpack.c.l.b16 %v399
        %v535 = vunpack.c.l.b16 %v400
        %v536 = vunpack.c.l.b16 %v401
        %v537 = vunpack.c.l.b16 %v402
        %v538 = vunpack.c.l.b16 %v403
        %v539 = vunpack.c.l.b16 %v404
        %v540 = vunpack.c.l.b16 %v405
        %v541 = vunpack.c.l.b16 %v406
        %v542 = vunpack.c.l.b16 %v407
        %v543 = vunpack.c.l.b16 %v408
        %v544 = vunpack.c.l.b16 %v409
        %v545 = vunpack.c.l.b16 %v410
        %v546 = vunpack.c.l.b16 %v411
        %v547 = vunpack.c.l.b16 %v412
        %v548 = vunpack.c.l.b16 %v413
        %v549 = vpack.c.b16 %v534, %v533
        %v550 = vpack.c.b16 %v536, %v535
        %v551 = vpack.c.b16 %v538, %v537
        %v552 = vpack.c.b16 %v540, %v539
        %v553 = vpack.c.b16 %v542, %v541
        %v554 = vpack.c.b16 %v544, %v543
        %v555 = vpack.c.b16 %v546, %v545
        %v556 = vpack.c.b16 %v548, %v547
        %565 = vmatprep.subr.bf16.mxu0 0
        %566 = vmatpush1.bf16.msra.mxu0 %v556
        %567 = vmatprep.subr.bf16.mxu0 0
        %568 = vmatpush1.bf16.msra.mxu0 %v555
        %569 = vmatprep.subr.bf16.mxu0 0
        %570 = vmatpush1.bf16.msra.mxu0 %v554
        %571 = vmatprep.subr.bf16.mxu0 0
        %572 = vmatpush1.bf16.msra.mxu0 %v553
        %573 = vmatprep.subr.bf16.mxu0 0
        %574 = vmatpush1.bf16.msra.mxu0 %v552
        %575 = vmatprep.subr.bf16.mxu0 0
        %576 = vmatpush1.bf16.msra.mxu0 %v551
        %577 = vmatprep.subr.bf16.mxu0 0
        %578 = vmatpush1.bf16.msra.mxu0 %v550
        %579 = vmatprep.subr.bf16.mxu0 0
        %580 = vmatpush1.bf16.msra.mxu0 %v549
        %581 = vmatprep.subr.bf16.mxu0 0
        %582 = vmatpush2.bf16.msra.mxu0 0
        %583 = vmatprep.subr.bf16.mxu0 0
        %584 = vmatpush2.bf16.msra.mxu0 0
        %585 = vmatprep.subr.bf16.mxu0 0
        %586 = vmatpush2.bf16.msra.mxu0 0
        %587 = vmatprep.subr.bf16.mxu0 0
        %588 = vmatpush2.bf16.msra.mxu0 0
        %589 = vmatprep.subr.bf16.mxu0 0
        %590 = vmatpush2.bf16.msra.mxu0 0
        %591 = vmatprep.subr.bf16.mxu0 0
        %592 = vmatpush2.bf16.msra.mxu0 0
        %593 = vmatprep.subr.bf16.mxu0 0
        %594 = vmatpush2.bf16.msra.mxu0 0
        %595 = vmatprep.subr.bf16.mxu0 0
        %596 = vmatpush2.bf16.msra.mxu0 0
        %597 = vmatprep.mubr.bf16.mxu0 0
        %598 = vmatmul.mubr.bf16.gmra.mxu0 %v485
        %v599 = vpop.f32.mrf.mxu0
        %v600 = vadd.f32 %v419, %v599
        %v601 = vpop.f32.mrf.mxu0
        %v602 = vpop.f32.mrf.mxu0
        %v603 = vadd.f32 %v419, %v602
        %v604 = vpop.f32.mrf.mxu0
        %605 = vmatprep.mubr.bf16.mxu0 0
        %606 = vmatmul.mubr.bf16.gmra.mxu0 %v486
        %v607 = vpop.f32.mrf.mxu0
        %v608 = vadd.f32 %v419, %v607
        %v609 = vpop.f32.mrf.mxu0
        %v610 = vpop.f32.mrf.mxu0
        %v611 = vadd.f32 %v419, %v610
        %v612 = vpop.f32.mrf.mxu0
        %613 = vmatprep.mubr.bf16.mxu0 0
        %614 = vmatmul.mubr.bf16.gmra.mxu0 %v487
        %v615 = vpop.f32.mrf.mxu0
        %v616 = vadd.f32 %v419, %v615
        %v617 = vpop.f32.mrf.mxu0
        %v618 = vpop.f32.mrf.mxu0
        %v619 = vadd.f32 %v419, %v618
        %v620 = vpop.f32.mrf.mxu0
        %621 = vmatprep.mubr.bf16.mxu0 0
        %622 = vmatmul.mubr.bf16.gmra.mxu0 %v488
        %v623 = vpop.f32.mrf.mxu0
        %v624 = vadd.f32 %v419, %v623
        %v625 = vpop.f32.mrf.mxu0
        %v626 = vpop.f32.mrf.mxu0
        %v627 = vadd.f32 %v419, %v626
        %v628 = vpop.f32.mrf.mxu0
        %629 = vmatprep.mubr.bf16.mxu0 0
        %630 = vmatmul.mubr.bf16.gmra.mxu0 %v489
        %v631 = vpop.f32.mrf.mxu0
        %v632 = vadd.f32 %v419, %v631
        %v633 = vpop.f32.mrf.mxu0
        %v634 = vpop.f32.mrf.mxu0
        %v635 = vadd.f32 %v419, %v634
        %v636 = vpop.f32.mrf.mxu0
        %637 = vmatprep.mubr.bf16.mxu0 0
        %638 = vmatmul.mubr.bf16.gmra.mxu0 %v490
        %v639 = vpop.f32.mrf.mxu0
        %v640 = vadd.f32 %v419, %v639
        %v641 = vpop.f32.mrf.mxu0
        %v642 = vpop.f32.mrf.mxu0
        %v643 = vadd.f32 %v419, %v642
        %v644 = vpop.f32.mrf.mxu0
        %645 = vmatprep.mubr.bf16.mxu0 0
        %646 = vmatmul.mubr.bf16.gmra.mxu0 %v491
        %v647 = vpop.f32.mrf.mxu0
        %v648 = vadd.f32 %v419, %v647
        %v649 = vpop.f32.mrf.mxu0
        %v650 = vpop.f32.mrf.mxu0
        %v651 = vadd.f32 %v419, %v650
        %v652 = vpop.f32.mrf.mxu0
        %653 = vmatprep.mubr.bf16.mxu0 0
        %654 = vmatmul.mubr.bf16.gmra.mxu0 %v492
        %v655 = vpop.f32.mrf.mxu0
        %v656 = vadd.f32 %v419, %v655
        %v657 = vpop.f32.mrf.mxu0
        %v658 = vpop.f32.mrf.mxu0
        %v659 = vadd.f32 %v419, %v658
        %v660 = vpop.f32.mrf.mxu0
        %661 = vmatprep.mubr.bf16.mxu0 0
        %662 = vmatmul.mubr.bf16.gmra.mxu0 %v493
        %v663 = vpop.f32.mrf.mxu0
        %v664 = vadd.f32 %v419, %v663
        %v665 = vpop.f32.mrf.mxu0
        %v666 = vpop.f32.mrf.mxu0
        %v667 = vadd.f32 %v419, %v666
        %v668 = vpop.f32.mrf.mxu0
        %669 = vmatprep.mubr.bf16.mxu0 0
        %670 = vmatmul.mubr.bf16.gmra.mxu0 %v494
        %v671 = vpop.f32.mrf.mxu0
        %v672 = vadd.f32 %v419, %v671
        %v673 = vpop.f32.mrf.mxu0
        %v674 = vpop.f32.mrf.mxu0
        %v675 = vadd.f32 %v419, %v674
        %v676 = vpop.f32.mrf.mxu0
        %677 = vmatprep.mubr.bf16.mxu0 0
        %678 = vmatmul.mubr.bf16.gmra.mxu0 %v495
        %v679 = vpop.f32.mrf.mxu0
        %v680 = vadd.f32 %v419, %v679
        %v681 = vpop.f32.mrf.mxu0
        %v682 = vpop.f32.mrf.mxu0
        %v683 = vadd.f32 %v419, %v682
        %v684 = vpop.f32.mrf.mxu0
        %685 = vmatprep.mubr.bf16.mxu0 0
        %686 = vmatmul.mubr.bf16.gmra.mxu0 %v496
        %v687 = vpop.f32.mrf.mxu0
        %v688 = vadd.f32 %v419, %v687
        %v689 = vpop.f32.mrf.mxu0
        %v690 = vpop.f32.mrf.mxu0
        %v691 = vadd.f32 %v419, %v690
        %v692 = vpop.f32.mrf.mxu0
        %693 = vmatprep.mubr.bf16.mxu0 0
        %694 = vmatmul.mubr.bf16.gmra.mxu0 %v497
        %v695 = vpop.f32.mrf.mxu0
        %v696 = vadd.f32 %v419, %v695
        %v697 = vpop.f32.mrf.mxu0
        %v698 = vpop.f32.mrf.mxu0
        %v699 = vadd.f32 %v419, %v698
        %v700 = vpop.f32.mrf.mxu0
        %701 = vmatprep.mubr.bf16.mxu0 0
        %702 = vmatmul.mubr.bf16.gmra.mxu0 %v498
        %v703 = vpop.f32.mrf.mxu0
        %v704 = vadd.f32 %v419, %v703
        %v705 = vpop.f32.mrf.mxu0
        %v706 = vpop.f32.mrf.mxu0
        %v707 = vadd.f32 %v419, %v706
        %v708 = vpop.f32.mrf.mxu0
        %709 = vmatprep.mubr.bf16.mxu0 0
        %710 = vmatmul.mubr.bf16.gmra.mxu0 %v499
        %v711 = vpop.f32.mrf.mxu0
        %v712 = vadd.f32 %v419, %v711
        %v713 = vpop.f32.mrf.mxu0
        %v714 = vpop.f32.mrf.mxu0
        %v715 = vadd.f32 %v419, %v714
        %v716 = vpop.f32.mrf.mxu0
        %717 = vmatprep.mubr.bf16.mxu0 0
        %718 = vmatmul.mubr.bf16.gmra.mxu0 %v500
        %v719 = vpop.f32.mrf.mxu0
        %v720 = vadd.f32 %v419, %v719
        %v721 = vpop.f32.mrf.mxu0
        %v722 = vpop.f32.mrf.mxu0
        %v723 = vadd.f32 %v419, %v722
        %v724 = vpop.f32.mrf.mxu0
        %725 = vdwg.mxu0
        %v726 = vmax.f32 %v600, 0.0
        %v727 = vmax.f32 %v603, 0.0
        %v728 = vmax.f32 %v608, 0.0
        %v729 = vmax.f32 %v611, 0.0
        %v730 = vmax.f32 %v616, 0.0
        %v731 = vmax.f32 %v619, 0.0
        %v732 = vmax.f32 %v624, 0.0
        %v733 = vmax.f32 %v627, 0.0
        %v734 = vmax.f32 %v632, 0.0
        %v735 = vmax.f32 %v635, 0.0
        %v736 = vmax.f32 %v640, 0.0
        %v737 = vmax.f32 %v643, 0.0
        %v738 = vmax.f32 %v648, 0.0
        %v739 = vmax.f32 %v651, 0.0
        %v740 = vmax.f32 %v656, 0.0
        %v741 = vmax.f32 %v659, 0.0
        %v742 = vmax.f32 %v664, 0.0
        %v743 = vmax.f32 %v667, 0.0
        %v744 = vmax.f32 %v672, 0.0
        %v745 = vmax.f32 %v675, 0.0
        %v746 = vmax.f32 %v680, 0.0
        %v747 = vmax.f32 %v683, 0.0
        %v748 = vmax.f32 %v688, 0.0
        %v749 = vmax.f32 %v691, 0.0
        %v750 = vmax.f32 %v696, 0.0
        %v751 = vmax.f32 %v699, 0.0
        %v752 = vmax.f32 %v704, 0.0
        %v753 = vmax.f32 %v707, 0.0
        %v754 = vmax.f32 %v712, 0.0
        %v755 = vmax.f32 %v715, 0.0
        %v756 = vmax.f32 %v720, 0.0
        %v757 = vmax.f32 %v723, 0.0
        %v758 = vld [vmem:[%s362] sm:$0xf]
        %v759 = vld [vmem:[%s362 + $0x4] sm:$0xf]
        %v760 = vld [vmem:[%s314] sm:$0xff]
        %v761 = vld [vmem:[%s314 + $0x8] sm:$0xff]
        %v762 = vld [vmem:[%s314 + $0x10] sm:$0xff]
        %v763 = vld [vmem:[%s314 + $0x18] sm:$0xff]
        %v766 = vunpack.c.l.b16 %v758
        %v767 = vunpack.c.l.b16 %v759
        %v768 = vpack.c.b16 %v767, %v766
        %v773 = vunpack.c.l.b16 %v760
        %v774 = vunpack.c.h.b16 %v760
        %v775 = vunpack.c.l.b16 %v761
        %v776 = vunpack.c.h.b16 %v761
        %v777 = vunpack.c.l.b16 %v762
        %v778 = vunpack.c.h.b16 %v762
        %v779 = vunpack.c.l.b16 %v763
        %v780 = vunpack.c.h.b16 %v763
        %v781 = vpack.c.b16 %v773, %v773
        %v782 = vpack.c.b16 %v774, %v774
        %v783 = vpack.c.b16 %v775, %v775
        %v784 = vpack.c.b16 %v776, %v776
        %v785 = vpack.c.b16 %v777, %v777
        %v786 = vpack.c.b16 %v778, %v778
        %v787 = vpack.c.b16 %v779, %v779
        %v788 = vpack.c.b16 %v780, %v780
        %vm789 = vcmask 64512
        %v791 = vsel %vm789, %v768, 0
        %vm793 = vcmask 1043456
        %v795 = vsel %vm793, %v781, 0
        %v798 = vsel %vm793, %v782, 0
        %v801 = vsel %vm793, %v783, 0
        %v804 = vsel %vm793, %v784, 0
        %v807 = vsel %vm793, %v785, 0
        %v810 = vsel %vm793, %v786, 0
        %v813 = vsel %vm793, %v787, 0
        %v816 = vsel %vm793, %v788, 0
        %818 = vmatprep.subr.bf16.mxu0 0
        %819 = vmatpush1.bf16.msra.mxu0 0
        %820 = vmatprep.subr.bf16.mxu0 0
        %821 = vmatpush1.bf16.msra.mxu0 0
        %822 = vmatprep.subr.bf16.mxu0 0
        %823 = vmatpush1.bf16.msra.mxu0 0
        %824 = vmatprep.subr.bf16.mxu0 0
        %825 = vmatpush1.bf16.msra.mxu0 0
        %826 = vmatprep.subr.bf16.mxu0 0
        %827 = vmatpush1.bf16.msra.mxu0 0
        %828 = vmatprep.subr.bf16.mxu0 0
        %829 = vmatpush1.bf16.msra.mxu0 0
        %830 = vmatprep.subr.bf16.mxu0 0
        %831 = vmatpush1.bf16.msra.mxu0 0
        %832 = vmatprep.subr.bf16.mxu0 %v798
        %833 = vmatpush1.bf16.msra.mxu0 %v795
        %834 = vmatprep.subr.bf16.mxu0 0
        %835 = vmatpush2.bf16.msra.mxu0 0
        %836 = vmatprep.subr.bf16.mxu0 0
        %837 = vmatpush2.bf16.msra.mxu0 0
        %838 = vmatprep.subr.bf16.mxu0 0
        %839 = vmatpush2.bf16.msra.mxu0 0
        %840 = vmatprep.subr.bf16.mxu0 0
        %841 = vmatpush2.bf16.msra.mxu0 0
        %842 = vmatprep.subr.bf16.mxu0 0
        %843 = vmatpush2.bf16.msra.mxu0 0
        %844 = vmatprep.subr.bf16.mxu0 0
        %845 = vmatpush2.bf16.msra.mxu0 0
        %846 = vmatprep.subr.bf16.mxu0 0
        %847 = vmatpush2.bf16.msra.mxu0 0
        %848 = vmatprep.subr.bf16.mxu0 0
        %849 = vmatpush2.bf16.msra.mxu0 0
        %850 = vmatprep.mubr.bf16.mxu0 0
        %851 = vmatmul.mubr.bf16.gmra.mxu0 %v791
        %v852 = vpop.f32.mrf.mxu0
        %v853 = vadd.f32 0.0, %v852
        %v854 = vpop.f32.mrf.mxu0
        %v855 = vadd.f32 0.0, %v854
        %v856 = vpop.f32.mrf.mxu0
        %v857 = vadd.f32 0.0, %v856
        %v858 = vpop.f32.mrf.mxu0
        %v859 = vadd.f32 0.0, %v858
        %860 = vdwg.mxu0
        %861 = vmatprep.subr.bf16.mxu0 0
        %862 = vmatpush1.bf16.msra.mxu0 0
        %863 = vmatprep.subr.bf16.mxu0 0
        %864 = vmatpush1.bf16.msra.mxu0 0
        %865 = vmatprep.subr.bf16.mxu0 0
        %866 = vmatpush1.bf16.msra.mxu0 0
        %867 = vmatprep.subr.bf16.mxu0 0
        %868 = vmatpush1.bf16.msra.mxu0 0
        %869 = vmatprep.subr.bf16.mxu0 0
        %870 = vmatpush1.bf16.msra.mxu0 0
        %871 = vmatprep.subr.bf16.mxu0 0
        %872 = vmatpush1.bf16.msra.mxu0 0
        %873 = vmatprep.subr.bf16.mxu0 0
        %874 = vmatpush1.bf16.msra.mxu0 0
        %875 = vmatprep.subr.bf16.mxu0 %v804
        %876 = vmatpush1.bf16.msra.mxu0 %v801
        %877 = vmatprep.subr.bf16.mxu0 0
        %878 = vmatpush2.bf16.msra.mxu0 0
        %879 = vmatprep.subr.bf16.mxu0 0
        %880 = vmatpush2.bf16.msra.mxu0 0
        %881 = vmatprep.subr.bf16.mxu0 0
        %882 = vmatpush2.bf16.msra.mxu0 0
        %883 = vmatprep.subr.bf16.mxu0 0
        %884 = vmatpush2.bf16.msra.mxu0 0
        %885 = vmatprep.subr.bf16.mxu0 0
        %886 = vmatpush2.bf16.msra.mxu0 0
        %887 = vmatprep.subr.bf16.mxu0 0
        %888 = vmatpush2.bf16.msra.mxu0 0
        %889 = vmatprep.subr.bf16.mxu0 0
        %890 = vmatpush2.bf16.msra.mxu0 0
        %891 = vmatprep.subr.bf16.mxu0 0
        %892 = vmatpush2.bf16.msra.mxu0 0
        %893 = vmatprep.mubr.bf16.mxu0 0
        %894 = vmatmul.mubr.bf16.gmra.mxu0 %v791
        %v895 = vpop.f32.mrf.mxu0
        %v896 = vadd.f32 0.0, %v895
        %v897 = vpop.f32.mrf.mxu0
        %v898 = vadd.f32 0.0, %v897
        %v899 = vpop.f32.mrf.mxu0
        %v900 = vadd.f32 0.0, %v899
        %v901 = vpop.f32.mrf.mxu0
        %v902 = vadd.f32 0.0, %v901
        %903 = vdwg.mxu0
        %904 = vmatprep.subr.bf16.mxu0 0
        %905 = vmatpush1.bf16.msra.mxu0 0
        %906 = vmatprep.subr.bf16.mxu0 0
        %907 = vmatpush1.bf16.msra.mxu0 0
        %908 = vmatprep.subr.bf16.mxu0 0
        %909 = vmatpush1.bf16.msra.mxu0 0
        %910 = vmatprep.subr.bf16.mxu0 0
        %911 = vmatpush1.bf16.msra.mxu0 0
        %912 = vmatprep.subr.bf16.mxu0 0
        %913 = vmatpush1.bf16.msra.mxu0 0
        %914 = vmatprep.subr.bf16.mxu0 0
        %915 = vmatpush1.bf16.msra.mxu0 0
        %916 = vmatprep.subr.bf16.mxu0 0
        %917 = vmatpush1.bf16.msra.mxu0 0
        %918 = vmatprep.subr.bf16.mxu0 %v810
        %919 = vmatpush1.bf16.msra.mxu0 %v807
        %920 = vmatprep.subr.bf16.mxu0 0
        %921 = vmatpush2.bf16.msra.mxu0 0
        %922 = vmatprep.subr.bf16.mxu0 0
        %923 = vmatpush2.bf16.msra.mxu0 0
        %924 = vmatprep.subr.bf16.mxu0 0
        %925 = vmatpush2.bf16.msra.mxu0 0
        %926 = vmatprep.subr.bf16.mxu0 0
        %927 = vmatpush2.bf16.msra.mxu0 0
        %928 = vmatprep.subr.bf16.mxu0 0
        %929 = vmatpush2.bf16.msra.mxu0 0
        %930 = vmatprep.subr.bf16.mxu0 0
        %931 = vmatpush2.bf16.msra.mxu0 0
        %932 = vmatprep.subr.bf16.mxu0 0
        %933 = vmatpush2.bf16.msra.mxu0 0
        %934 = vmatprep.subr.bf16.mxu0 0
        %935 = vmatpush2.bf16.msra.mxu0 0
        %936 = vmatprep.mubr.bf16.mxu0 0
        %937 = vmatmul.mubr.bf16.gmra.mxu0 %v791
        %v938 = vpop.f32.mrf.mxu0
        %v939 = vadd.f32 0.0, %v938
        %v940 = vpop.f32.mrf.mxu0
        %v941 = vadd.f32 0.0, %v940
        %v942 = vpop.f32.mrf.mxu0
        %v943 = vadd.f32 0.0, %v942
        %v944 = vpop.f32.mrf.mxu0
        %v945 = vadd.f32 0.0, %v944
        %946 = vdwg.mxu0
        %947 = vmatprep.subr.bf16.mxu0 0
        %948 = vmatpush1.bf16.msra.mxu0 0
        %949 = vmatprep.subr.bf16.mxu0 0
        %950 = vmatpush1.bf16.msra.mxu0 0
        %951 = vmatprep.subr.bf16.mxu0 0
        %952 = vmatpush1.bf16.msra.mxu0 0
        %953 = vmatprep.subr.bf16.mxu0 0
        %954 = vmatpush1.bf16.msra.mxu0 0
        %955 = vmatprep.subr.bf16.mxu0 0
        %956 = vmatpush1.bf16.msra.mxu0 0
        %957 = vmatprep.subr.bf16.mxu0 0
        %958 = vmatpush1.bf16.msra.mxu0 0
        %959 = vmatprep.subr.bf16.mxu0 0
        %960 = vmatpush1.bf16.msra.mxu0 0
        %961 = vmatprep.subr.bf16.mxu0 %v816
        %962 = vmatpush1.bf16.msra.mxu0 %v813
        %963 = vmatprep.subr.bf16.mxu0 0
        %964 = vmatpush2.bf16.msra.mxu0 0
        %965 = vmatprep.subr.bf16.mxu0 0
        %966 = vmatpush2.bf16.msra.mxu0 0
        %967 = vmatprep.subr.bf16.mxu0 0
        %968 = vmatpush2.bf16.msra.mxu0 0
        %969 = vmatprep.subr.bf16.mxu0 0
        %970 = vmatpush2.bf16.msra.mxu0 0
        %971 = vmatprep.subr.bf16.mxu0 0
        %972 = vmatpush2.bf16.msra.mxu0 0
        %973 = vmatprep.subr.bf16.mxu0 0
        %974 = vmatpush2.bf16.msra.mxu0 0
        %975 = vmatprep.subr.bf16.mxu0 0
        %976 = vmatpush2.bf16.msra.mxu0 0
        %977 = vmatprep.subr.bf16.mxu0 0
        %978 = vmatpush2.bf16.msra.mxu0 0
        %979 = vmatprep.mubr.bf16.mxu0 0
        %980 = vmatmul.mubr.bf16.gmra.mxu0 %v791
        %v981 = vpop.f32.mrf.mxu0
        %v982 = vadd.f32 0.0, %v981
        %v983 = vpop.f32.mrf.mxu0
        %v984 = vadd.f32 0.0, %v983
        %v985 = vpop.f32.mrf.mxu0
        %v986 = vadd.f32 0.0, %v985
        %v987 = vpop.f32.mrf.mxu0
        %v988 = vadd.f32 0.0, %v987
        %989 = vdwg.mxu0
        %v990 = vcombine.low %v853, %v896
        %v991 = vcombine.high %v853, %v896
        %v993 = vunpack.c.l.s4 1983009808
        %v994 = vunpack.c.0.s8 %v993
        %v995 = vlaneseq
        %v996 = vshrl.u32 %v995, 7
        %v997 = vsub.s32 %v994, %v996
        %v998 = vrot.slane %v990, %v997
        %v1000 = vunpack.c.l.s4 1983009808
        %v1001 = vunpack.c.0.s8 %v1000
        %v1002 = vlaneseq
        %v1003 = vshrl.u32 %v1002, 7
        %v1004 = vsub.s32 %v1001, %v1003
        %v1005 = vrot.slane %v991, %v1004
        %v1006 = vcombine.low %v855, %v898
        %v1007 = vcombine.high %v855, %v898
        %v1009 = vunpack.c.l.s4 1983009808
        %v1010 = vunpack.c.0.s8 %v1009
        %v1011 = vlaneseq
        %v1012 = vshrl.u32 %v1011, 7
        %v1013 = vsub.s32 %v1010, %v1012
        %v1014 = vrot.slane %v1006, %v1013
        %v1016 = vunpack.c.l.s4 1983009808
        %v1017 = vunpack.c.0.s8 %v1016
        %v1018 = vlaneseq
        %v1019 = vshrl.u32 %v1018, 7
        %v1020 = vsub.s32 %v1017, %v1019
        %v1021 = vrot.slane %v1007, %v1020
        %v1022 = vcombine.low %v939, %v982
        %v1023 = vcombine.high %v939, %v982
        %v1025 = vunpack.c.l.s4 1983009808
        %v1026 = vunpack.c.0.s8 %v1025
        %v1027 = vlaneseq
        %v1028 = vshrl.u32 %v1027, 7
        %v1029 = vsub.s32 %v1026, %v1028
        %v1030 = vrot.slane %v1022, %v1029
        %v1032 = vunpack.c.l.s4 1983009808
        %v1033 = vunpack.c.0.s8 %v1032
        %v1034 = vlaneseq
        %v1035 = vshrl.u32 %v1034, 7
        %v1036 = vsub.s32 %v1033, %v1035
        %v1037 = vrot.slane %v1023, %v1036
        %v1038 = vcombine.low %v941, %v984
        %v1039 = vcombine.high %v941, %v984
        %v1041 = vunpack.c.l.s4 1983009808
        %v1042 = vunpack.c.0.s8 %v1041
        %v1043 = vlaneseq
        %v1044 = vshrl.u32 %v1043, 7
        %v1045 = vsub.s32 %v1042, %v1044
        %v1046 = vrot.slane %v1038, %v1045
        %v1048 = vunpack.c.l.s4 1983009808
        %v1049 = vunpack.c.0.s8 %v1048
        %v1050 = vlaneseq
        %v1051 = vshrl.u32 %v1050, 7
        %v1052 = vsub.s32 %v1049, %v1051
        %v1053 = vrot.slane %v1039, %v1052
        %v1054 = vcombine.low %v998, %v1014
        %v1055 = vcombine.high %v998, %v1014
        %v1057 = vunpack.c.l.s4 1934713408
        %v1058 = vunpack.c.0.s8 %v1057
        %v1059 = vlaneseq
        %v1060 = vshrl.u32 %v1059, 7
        %v1061 = vsub.s32 %v1058, %v1060
        %v1062 = vrot.slane %v1054, %v1061
        %v1064 = vunpack.c.l.s4 1934713408
        %v1065 = vunpack.c.0.s8 %v1064
        %v1066 = vlaneseq
        %v1067 = vshrl.u32 %v1066, 7
        %v1068 = vsub.s32 %v1065, %v1067
        %v1069 = vrot.slane %v1055, %v1068
        %v1070 = vcombine.low %v1005, %v1021
        %v1071 = vcombine.high %v1005, %v1021
        %v1073 = vunpack.c.l.s4 1934713408
        %v1074 = vunpack.c.0.s8 %v1073
        %v1075 = vlaneseq
        %v1076 = vshrl.u32 %v1075, 7
        %v1077 = vsub.s32 %v1074, %v1076
        %v1078 = vrot.slane %v1070, %v1077
        %v1080 = vunpack.c.l.s4 1934713408
        %v1081 = vunpack.c.0.s8 %v1080
        %v1082 = vlaneseq
        %v1083 = vshrl.u32 %v1082, 7
        %v1084 = vsub.s32 %v1081, %v1083
        %v1085 = vrot.slane %v1071, %v1084
        %v1086 = vcombine.low %v1030, %v1046
        %v1087 = vcombine.high %v1030, %v1046
        %v1089 = vunpack.c.l.s4 1934713408
        %v1090 = vunpack.c.0.s8 %v1089
        %v1091 = vlaneseq
        %v1092 = vshrl.u32 %v1091, 7
        %v1093 = vsub.s32 %v1090, %v1092
        %v1094 = vrot.slane %v1086, %v1093
        %v1096 = vunpack.c.l.s4 1934713408
        %v1097 = vunpack.c.0.s8 %v1096
        %v1098 = vlaneseq
        %v1099 = vshrl.u32 %v1098, 7
        %v1100 = vsub.s32 %v1097, %v1099
        %v1101 = vrot.slane %v1087, %v1100
        %v1102 = vcombine.low %v1037, %v1053
        %v1103 = vcombine.high %v1037, %v1053
        %v1105 = vunpack.c.l.s4 1934713408
        %v1106 = vunpack.c.0.s8 %v1105
        %v1107 = vlaneseq
        %v1108 = vshrl.u32 %v1107, 7
        %v1109 = vsub.s32 %v1106, %v1108
        %v1110 = vrot.slane %v1102, %v1109
        %v1112 = vunpack.c.l.s4 1934713408
        %v1113 = vunpack.c.0.s8 %v1112
        %v1114 = vlaneseq
        %v1115 = vshrl.u32 %v1114, 7
        %v1116 = vsub.s32 %v1113, %v1115
        %v1117 = vrot.slane %v1103, %v1116
        %v1118 = vcombine.low %v1062, %v1094
        %v1119 = vcombine.high %v1062, %v1094
        %v1120 = vcombine.low %v1069, %v1101
        %v1121 = vcombine.high %v1069, %v1101
        %v1122 = vcombine.low %v1078, %v1110
        %v1123 = vcombine.high %v1078, %v1110
        %v1124 = vcombine.low %v1085, %v1117
        %v1125 = vcombine.high %v1085, %v1117
        %v1126 = vcombine.low %v857, %v900
        %v1127 = vcombine.high %v857, %v900
        %v1129 = vunpack.c.l.s4 1983009808
        %v1130 = vunpack.c.0.s8 %v1129
        %v1131 = vlaneseq
        %v1132 = vshrl.u32 %v1131, 7
        %v1133 = vsub.s32 %v1130, %v1132
        %v1134 = vrot.slane %v1126, %v1133
        %v1136 = vunpack.c.l.s4 1983009808
        %v1137 = vunpack.c.0.s8 %v1136
        %v1138 = vlaneseq
        %v1139 = vshrl.u32 %v1138, 7
        %v1140 = vsub.s32 %v1137, %v1139
        %v1141 = vrot.slane %v1127, %v1140
        %v1142 = vcombine.low %v859, %v902
        %v1143 = vcombine.high %v859, %v902
        %v1145 = vunpack.c.l.s4 1983009808
        %v1146 = vunpack.c.0.s8 %v1145
        %v1147 = vlaneseq
        %v1148 = vshrl.u32 %v1147, 7
        %v1149 = vsub.s32 %v1146, %v1148
        %v1150 = vrot.slane %v1142, %v1149
        %v1152 = vunpack.c.l.s4 1983009808
        %v1153 = vunpack.c.0.s8 %v1152
        %v1154 = vlaneseq
        %v1155 = vshrl.u32 %v1154, 7
        %v1156 = vsub.s32 %v1153, %v1155
        %v1157 = vrot.slane %v1143, %v1156
        %v1158 = vcombine.low %v943, %v986
        %v1159 = vcombine.high %v943, %v986
        %v1161 = vunpack.c.l.s4 1983009808
        %v1162 = vunpack.c.0.s8 %v1161
        %v1163 = vlaneseq
        %v1164 = vshrl.u32 %v1163, 7
        %v1165 = vsub.s32 %v1162, %v1164
        %v1166 = vrot.slane %v1158, %v1165
        %v1168 = vunpack.c.l.s4 1983009808
        %v1169 = vunpack.c.0.s8 %v1168
        %v1170 = vlaneseq
        %v1171 = vshrl.u32 %v1170, 7
        %v1172 = vsub.s32 %v1169, %v1171
        %v1173 = vrot.slane %v1159, %v1172
        %v1174 = vcombine.low %v945, %v988
        %v1175 = vcombine.high %v945, %v988
        %v1177 = vunpack.c.l.s4 1983009808
        %v1178 = vunpack.c.0.s8 %v1177
        %v1179 = vlaneseq
        %v1180 = vshrl.u32 %v1179, 7
        %v1181 = vsub.s32 %v1178, %v1180
        %v1182 = vrot.slane %v1174, %v1181
        %v1184 = vunpack.c.l.s4 1983009808
        %v1185 = vunpack.c.0.s8 %v1184
        %v1186 = vlaneseq
        %v1187 = vshrl.u32 %v1186, 7
        %v1188 = vsub.s32 %v1185, %v1187
        %v1189 = vrot.slane %v1175, %v1188
        %v1190 = vcombine.low %v1134, %v1150
        %v1191 = vcombine.high %v1134, %v1150
        %v1193 = vunpack.c.l.s4 1934713408
        %v1194 = vunpack.c.0.s8 %v1193
        %v1195 = vlaneseq
        %v1196 = vshrl.u32 %v1195, 7
        %v1197 = vsub.s32 %v1194, %v1196
        %v1198 = vrot.slane %v1190, %v1197
        %v1200 = vunpack.c.l.s4 1934713408
        %v1201 = vunpack.c.0.s8 %v1200
        %v1202 = vlaneseq
        %v1203 = vshrl.u32 %v1202, 7
        %v1204 = vsub.s32 %v1201, %v1203
        %v1205 = vrot.slane %v1191, %v1204
        %v1206 = vcombine.low %v1141, %v1157
        %v1207 = vcombine.high %v1141, %v1157
        %v1209 = vunpack.c.l.s4 1934713408
        %v1210 = vunpack.c.0.s8 %v1209
        %v1211 = vlaneseq
        %v1212 = vshrl.u32 %v1211, 7
        %v1213 = vsub.s32 %v1210, %v1212
        %v1214 = vrot.slane %v1206, %v1213
        %v1216 = vunpack.c.l.s4 1934713408
        %v1217 = vunpack.c.0.s8 %v1216
        %v1218 = vlaneseq
        %v1219 = vshrl.u32 %v1218, 7
        %v1220 = vsub.s32 %v1217, %v1219
        %v1221 = vrot.slane %v1207, %v1220
        %v1222 = vcombine.low %v1166, %v1182
        %v1223 = vcombine.high %v1166, %v1182
        %v1225 = vunpack.c.l.s4 1934713408
        %v1226 = vunpack.c.0.s8 %v1225
        %v1227 = vlaneseq
        %v1228 = vshrl.u32 %v1227, 7
        %v1229 = vsub.s32 %v1226, %v1228
        %v1230 = vrot.slane %v1222, %v1229
        %v1232 = vunpack.c.l.s4 1934713408
        %v1233 = vunpack.c.0.s8 %v1232
        %v1234 = vlaneseq
        %v1235 = vshrl.u32 %v1234, 7
        %v1236 = vsub.s32 %v1233, %v1235
        %v1237 = vrot.slane %v1223, %v1236
        %v1238 = vcombine.low %v1173, %v1189
        %v1239 = vcombine.high %v1173, %v1189
        %v1241 = vunpack.c.l.s4 1934713408
        %v1242 = vunpack.c.0.s8 %v1241
        %v1243 = vlaneseq
        %v1244 = vshrl.u32 %v1243, 7
        %v1245 = vsub.s32 %v1242, %v1244
        %v1246 = vrot.slane %v1238, %v1245
        %v1248 = vunpack.c.l.s4 1934713408
        %v1249 = vunpack.c.0.s8 %v1248
        %v1250 = vlaneseq
        %v1251 = vshrl.u32 %v1250, 7
        %v1252 = vsub.s32 %v1249, %v1251
        %v1253 = vrot.slane %v1239, %v1252
        %v1254 = vcombine.low %v1198, %v1230
        %v1255 = vcombine.high %v1198, %v1230
        %v1256 = vcombine.low %v1205, %v1237
        %v1257 = vcombine.high %v1205, %v1237
        %v1258 = vcombine.low %v1214, %v1246
        %v1259 = vcombine.high %v1214, %v1246
        %v1260 = vcombine.low %v1221, %v1253
        %v1261 = vcombine.high %v1221, %v1253
        %v1262 = vpack.c.bf16 %v1118, %v1118
        %v1263 = vpack.c.bf16 %v1119, %v1119
        %v1264 = vpack.c.bf16 %v1120, %v1120
        %v1265 = vpack.c.bf16 %v1121, %v1121
        %v1266 = vpack.c.bf16 %v1122, %v1122
        %v1267 = vpack.c.bf16 %v1123, %v1123
        %v1268 = vpack.c.bf16 %v1124, %v1124
        %v1269 = vpack.c.bf16 %v1125, %v1125
        %v1270 = vpack.c.bf16 %v1254, %v1254
        %v1271 = vpack.c.bf16 %v1255, %v1255
        %v1272 = vpack.c.bf16 %v1256, %v1256
        %v1273 = vpack.c.bf16 %v1257, %v1257
        %v1274 = vpack.c.bf16 %v1258, %v1258
        %v1275 = vpack.c.bf16 %v1259, %v1259
        %v1276 = vpack.c.bf16 %v1260, %v1260
        %v1277 = vpack.c.bf16 %v1261, %v1261
        %v1278 = vld [vmem:[%s3] sm:$0xf]
        %v1279 = vld [vmem:[%s3 + $0x4] sm:$0xf]
        %v1282 = vunpack.c.l.b16 %v1278
        %v1283 = vunpack.c.l.b16 %v1279
        %v1284 = vpack.c.b16 %v1283, %v1282
        %v1286 = vsel %vm789, %v1284, 0
        %v1289 = vsel %vm793, %v1262, 0
        %1291 = vmatprep.subr.bf16.mxu0 0
        %1292 = vmatpush1.bf16.msra.mxu0 0
        %1293 = vmatprep.subr.bf16.mxu0 0
        %1294 = vmatpush1.bf16.msra.mxu0 0
        %1295 = vmatprep.subr.bf16.mxu0 0
        %1296 = vmatpush1.bf16.msra.mxu0 0
        %1297 = vmatprep.subr.bf16.mxu0 0
        %1298 = vmatpush1.bf16.msra.mxu0 0
        %1299 = vmatprep.subr.bf16.mxu0 0
        %1300 = vmatpush1.bf16.msra.mxu0 0
        %1301 = vmatprep.subr.bf16.mxu0 0
        %1302 = vmatpush1.bf16.msra.mxu0 0
        %1303 = vmatprep.subr.bf16.mxu0 0
        %1304 = vmatpush1.bf16.msra.mxu0 0
        %1305 = vmatprep.subr.bf16.mxu0 0
        %1306 = vmatpush1.bf16.msra.mxu0 %v1289
        %1307 = vmatprep.subr.bf16.mxu0 0
        %1308 = vmatpush2.bf16.msra.mxu0 0
        %1309 = vmatprep.subr.bf16.mxu0 0
        %1310 = vmatpush2.bf16.msra.mxu0 0
        %1311 = vmatprep.subr.bf16.mxu0 0
        %1312 = vmatpush2.bf16.msra.mxu0 0
        %1313 = vmatprep.subr.bf16.mxu0 0
        %1314 = vmatpush2.bf16.msra.mxu0 0
        %1315 = vmatprep.subr.bf16.mxu0 0
        %1316 = vmatpush2.bf16.msra.mxu0 0
        %1317 = vmatprep.subr.bf16.mxu0 0
        %1318 = vmatpush2.bf16.msra.mxu0 0
        %1319 = vmatprep.subr.bf16.mxu0 0
        %1320 = vmatpush2.bf16.msra.mxu0 0
        %1321 = vmatprep.subr.bf16.mxu0 0
        %1322 = vmatpush2.bf16.msra.mxu0 0
        %1323 = vmatprep.mubr.bf16.mxu0 0
        %1324 = vmatmul.mubr.bf16.gmra.mxu0 %v1286
        %v1325 = vpop.f32.mrf.mxu0
        %v1326 = vadd.f32 %v726, %v1325
        %v1327 = vpop.f32.mrf.mxu0
        %v1328 = vpop.f32.mrf.mxu0
        %v1329 = vadd.f32 %v727, %v1328
        %v1330 = vpop.f32.mrf.mxu0
        %1331 = vdwg.mxu0
        %v1333 = vsel %vm793, %v1263, 0
        %1335 = vmatprep.subr.bf16.mxu0 0
        %1336 = vmatpush1.bf16.msra.mxu0 0
        %1337 = vmatprep.subr.bf16.mxu0 0
        %1338 = vmatpush1.bf16.msra.mxu0 0
        %1339 = vmatprep.subr.bf16.mxu0 0
        %1340 = vmatpush1.bf16.msra.mxu0 0
        %1341 = vmatprep.subr.bf16.mxu0 0
        %1342 = vmatpush1.bf16.msra.mxu0 0
        %1343 = vmatprep.subr.bf16.mxu0 0
        %1344 = vmatpush1.bf16.msra.mxu0 0
        %1345 = vmatprep.subr.bf16.mxu0 0
        %1346 = vmatpush1.bf16.msra.mxu0 0
        %1347 = vmatprep.subr.bf16.mxu0 0
        %1348 = vmatpush1.bf16.msra.mxu0 0
        %1349 = vmatprep.subr.bf16.mxu0 0
        %1350 = vmatpush1.bf16.msra.mxu0 %v1333
        %1351 = vmatprep.subr.bf16.mxu0 0
        %1352 = vmatpush2.bf16.msra.mxu0 0
        %1353 = vmatprep.subr.bf16.mxu0 0
        %1354 = vmatpush2.bf16.msra.mxu0 0
        %1355 = vmatprep.subr.bf16.mxu0 0
        %1356 = vmatpush2.bf16.msra.mxu0 0
        %1357 = vmatprep.subr.bf16.mxu0 0
        %1358 = vmatpush2.bf16.msra.mxu0 0
        %1359 = vmatprep.subr.bf16.mxu0 0
        %1360 = vmatpush2.bf16.msra.mxu0 0
        %1361 = vmatprep.subr.bf16.mxu0 0
        %1362 = vmatpush2.bf16.msra.mxu0 0
        %1363 = vmatprep.subr.bf16.mxu0 0
        %1364 = vmatpush2.bf16.msra.mxu0 0
        %1365 = vmatprep.subr.bf16.mxu0 0
        %1366 = vmatpush2.bf16.msra.mxu0 0
        %1367 = vmatprep.mubr.bf16.mxu0 0
        %1368 = vmatmul.mubr.bf16.gmra.mxu0 %v1286
        %v1369 = vpop.f32.mrf.mxu0
        %v1370 = vadd.f32 %v728, %v1369
        %v1371 = vpop.f32.mrf.mxu0
        %v1372 = vpop.f32.mrf.mxu0
        %v1373 = vadd.f32 %v729, %v1372
        %v1374 = vpop.f32.mrf.mxu0
        %1375 = vdwg.mxu0
        %v1377 = vsel %vm793, %v1264, 0
        %1379 = vmatprep.subr.bf16.mxu0 0
        %1380 = vmatpush1.bf16.msra.mxu0 0
        %1381 = vmatprep.subr.bf16.mxu0 0
        %1382 = vmatpush1.bf16.msra.mxu0 0
        %1383 = vmatprep.subr.bf16.mxu0 0
        %1384 = vmatpush1.bf16.msra.mxu0 0
        %1385 = vmatprep.subr.bf16.mxu0 0
        %1386 = vmatpush1.bf16.msra.mxu0 0
        %1387 = vmatprep.subr.bf16.mxu0 0
        %1388 = vmatpush1.bf16.msra.mxu0 0
        %1389 = vmatprep.subr.bf16.mxu0 0
        %1390 = vmatpush1.bf16.msra.mxu0 0
        %1391 = vmatprep.subr.bf16.mxu0 0
        %1392 = vmatpush1.bf16.msra.mxu0 0
        %1393 = vmatprep.subr.bf16.mxu0 0
        %1394 = vmatpush1.bf16.msra.mxu0 %v1377
        %1395 = vmatprep.subr.bf16.mxu0 0
        %1396 = vmatpush2.bf16.msra.mxu0 0
        %1397 = vmatprep.subr.bf16.mxu0 0
        %1398 = vmatpush2.bf16.msra.mxu0 0
        %1399 = vmatprep.subr.bf16.mxu0 0
        %1400 = vmatpush2.bf16.msra.mxu0 0
        %1401 = vmatprep.subr.bf16.mxu0 0
        %1402 = vmatpush2.bf16.msra.mxu0 0
        %1403 = vmatprep.subr.bf16.mxu0 0
        %1404 = vmatpush2.bf16.msra.mxu0 0
        %1405 = vmatprep.subr.bf16.mxu0 0
        %1406 = vmatpush2.bf16.msra.mxu0 0
        %1407 = vmatprep.subr.bf16.mxu0 0
        %1408 = vmatpush2.bf16.msra.mxu0 0
        %1409 = vmatprep.subr.bf16.mxu0 0
        %1410 = vmatpush2.bf16.msra.mxu0 0
        %1411 = vmatprep.mubr.bf16.mxu0 0
        %1412 = vmatmul.mubr.bf16.gmra.mxu0 %v1286
        %v1413 = vpop.f32.mrf.mxu0
        %v1414 = vadd.f32 %v730, %v1413
        %v1415 = vpop.f32.mrf.mxu0
        %v1416 = vpop.f32.mrf.mxu0
        %v1417 = vadd.f32 %v731, %v1416
        %v1418 = vpop.f32.mrf.mxu0
        %1419 = vdwg.mxu0
        %v1421 = vsel %vm793, %v1265, 0
        %1423 = vmatprep.subr.bf16.mxu0 0
        %1424 = vmatpush1.bf16.msra.mxu0 0
        %1425 = vmatprep.subr.bf16.mxu0 0
        %1426 = vmatpush1.bf16.msra.mxu0 0
        %1427 = vmatprep.subr.bf16.mxu0 0
        %1428 = vmatpush1.bf16.msra.mxu0 0
        %1429 = vmatprep.subr.bf16.mxu0 0
        %1430 = vmatpush1.bf16.msra.mxu0 0
        %1431 = vmatprep.subr.bf16.mxu0 0
        %1432 = vmatpush1.bf16.msra.mxu0 0
        %1433 = vmatprep.subr.bf16.mxu0 0
        %1434 = vmatpush1.bf16.msra.mxu0 0
        %1435 = vmatprep.subr.bf16.mxu0 0
        %1436 = vmatpush1.bf16.msra.mxu0 0
        %1437 = vmatprep.subr.bf16.mxu0 0
        %1438 = vmatpush1.bf16.msra.mxu0 %v1421
        %1439 = vmatprep.subr.bf16.mxu0 0
        %1440 = vmatpush2.bf16.msra.mxu0 0
        %1441 = vmatprep.subr.bf16.mxu0 0
        %1442 = vmatpush2.bf16.msra.mxu0 0
        %1443 = vmatprep.subr.bf16.mxu0 0
        %1444 = vmatpush2.bf16.msra.mxu0 0
        %1445 = vmatprep.subr.bf16.mxu0 0
        %1446 = vmatpush2.bf16.msra.mxu0 0
        %1447 = vmatprep.subr.bf16.mxu0 0
        %1448 = vmatpush2.bf16.msra.mxu0 0
        %1449 = vmatprep.subr.bf16.mxu0 0
        %1450 = vmatpush2.bf16.msra.mxu0 0
        %1451 = vmatprep.subr.bf16.mxu0 0
        %1452 = vmatpush2.bf16.msra.mxu0 0
        %1453 = vmatprep.subr.bf16.mxu0 0
        %1454 = vmatpush2.bf16.msra.mxu0 0
        %1455 = vmatprep.mubr.bf16.mxu0 0
        %1456 = vmatmul.mubr.bf16.gmra.mxu0 %v1286
        %v1457 = vpop.f32.mrf.mxu0
        %v1458 = vadd.f32 %v732, %v1457
        %v1459 = vpop.f32.mrf.mxu0
        %v1460 = vpop.f32.mrf.mxu0
        %v1461 = vadd.f32 %v733, %v1460
        %v1462 = vpop.f32.mrf.mxu0
        %1463 = vdwg.mxu0
        %v1465 = vsel %vm793, %v1266, 0
        %1467 = vmatprep.subr.bf16.mxu0 0
        %1468 = vmatpush1.bf16.msra.mxu0 0
        %1469 = vmatprep.subr.bf16.mxu0 0
        %1470 = vmatpush1.bf16.msra.mxu0 0
        %1471 = vmatprep.subr.bf16.mxu0 0
        %1472 = vmatpush1.bf16.msra.mxu0 0
        %1473 = vmatprep.subr.bf16.mxu0 0
        %1474 = vmatpush1.bf16.msra.mxu0 0
        %1475 = vmatprep.subr.bf16.mxu0 0
        %1476 = vmatpush1.bf16.msra.mxu0 0
        %1477 = vmatprep.subr.bf16.mxu0 0
        %1478 = vmatpush1.bf16.msra.mxu0 0
        %1479 = vmatprep.subr.bf16.mxu0 0
        %1480 = vmatpush1.bf16.msra.mxu0 0
        %1481 = vmatprep.subr.bf16.mxu0 0
        %1482 = vmatpush1.bf16.msra.mxu0 %v1465
        %1483 = vmatprep.subr.bf16.mxu0 0
        %1484 = vmatpush2.bf16.msra.mxu0 0
        %1485 = vmatprep.subr.bf16.mxu0 0
        %1486 = vmatpush2.bf16.msra.mxu0 0
        %1487 = vmatprep.subr.bf16.mxu0 0
        %1488 = vmatpush2.bf16.msra.mxu0 0
        %1489 = vmatprep.subr.bf16.mxu0 0
        %1490 = vmatpush2.bf16.msra.mxu0 0
        %1491 = vmatprep.subr.bf16.mxu0 0
        %1492 = vmatpush2.bf16.msra.mxu0 0
        %1493 = vmatprep.subr.bf16.mxu0 0
        %1494 = vmatpush2.bf16.msra.mxu0 0
        %1495 = vmatprep.subr.bf16.mxu0 0
        %1496 = vmatpush2.bf16.msra.mxu0 0
        %1497 = vmatprep.subr.bf16.mxu0 0
        %1498 = vmatpush2.bf16.msra.mxu0 0
        %1499 = vmatprep.mubr.bf16.mxu0 0
        %1500 = vmatmul.mubr.bf16.gmra.mxu0 %v1286
        %v1501 = vpop.f32.mrf.mxu0
        %v1502 = vadd.f32 %v734, %v1501
        %v1503 = vpop.f32.mrf.mxu0
        %v1504 = vpop.f32.mrf.mxu0
        %v1505 = vadd.f32 %v735, %v1504
        %v1506 = vpop.f32.mrf.mxu0
        %1507 = vdwg.mxu0
        %v1509 = vsel %vm793, %v1267, 0
        %1511 = vmatprep.subr.bf16.mxu0 0
        %1512 = vmatpush1.bf16.msra.mxu0 0
        %1513 = vmatprep.subr.bf16.mxu0 0
        %1514 = vmatpush1.bf16.msra.mxu0 0
        %1515 = vmatprep.subr.bf16.mxu0 0
        %1516 = vmatpush1.bf16.msra.mxu0 0
        %1517 = vmatprep.subr.bf16.mxu0 0
        %1518 = vmatpush1.bf16.msra.mxu0 0
        %1519 = vmatprep.subr.bf16.mxu0 0
        %1520 = vmatpush1.bf16.msra.mxu0 0
        %1521 = vmatprep.subr.bf16.mxu0 0
        %1522 = vmatpush1.bf16.msra.mxu0 0
        %1523 = vmatprep.subr.bf16.mxu0 0
        %1524 = vmatpush1.bf16.msra.mxu0 0
        %1525 = vmatprep.subr.bf16.mxu0 0
        %1526 = vmatpush1.bf16.msra.mxu0 %v1509
        %1527 = vmatprep.subr.bf16.mxu0 0
        %1528 = vmatpush2.bf16.msra.mxu0 0
        %1529 = vmatprep.subr.bf16.mxu0 0
        %1530 = vmatpush2.bf16.msra.mxu0 0
        %1531 = vmatprep.subr.bf16.mxu0 0
        %1532 = vmatpush2.bf16.msra.mxu0 0
        %1533 = vmatprep.subr.bf16.mxu0 0
        %1534 = vmatpush2.bf16.msra.mxu0 0
        %1535 = vmatprep.subr.bf16.mxu0 0
        %1536 = vmatpush2.bf16.msra.mxu0 0
        %1537 = vmatprep.subr.bf16.mxu0 0
        %1538 = vmatpush2.bf16.msra.mxu0 0
        %1539 = vmatprep.subr.bf16.mxu0 0
        %1540 = vmatpush2.bf16.msra.mxu0 0
        %1541 = vmatprep.subr.bf16.mxu0 0
        %1542 = vmatpush2.bf16.msra.mxu0 0
        %1543 = vmatprep.mubr.bf16.mxu0 0
        %1544 = vmatmul.mubr.bf16.gmra.mxu0 %v1286
        %v1545 = vpop.f32.mrf.mxu0
        %v1546 = vadd.f32 %v736, %v1545
        %v1547 = vpop.f32.mrf.mxu0
        %v1548 = vpop.f32.mrf.mxu0
        %v1549 = vadd.f32 %v737, %v1548
        %v1550 = vpop.f32.mrf.mxu0
        %1551 = vdwg.mxu0
        %v1553 = vsel %vm793, %v1268, 0
        %1555 = vmatprep.subr.bf16.mxu0 0
        %1556 = vmatpush1.bf16.msra.mxu0 0
        %1557 = vmatprep.subr.bf16.mxu0 0
        %1558 = vmatpush1.bf16.msra.mxu0 0
        %1559 = vmatprep.subr.bf16.mxu0 0
        %1560 = vmatpush1.bf16.msra.mxu0 0
        %1561 = vmatprep.subr.bf16.mxu0 0
        %1562 = vmatpush1.bf16.msra.mxu0 0
        %1563 = vmatprep.subr.bf16.mxu0 0
        %1564 = vmatpush1.bf16.msra.mxu0 0
        %1565 = vmatprep.subr.bf16.mxu0 0
        %1566 = vmatpush1.bf16.msra.mxu0 0
        %1567 = vmatprep.subr.bf16.mxu0 0
        %1568 = vmatpush1.bf16.msra.mxu0 0
        %1569 = vmatprep.subr.bf16.mxu0 0
        %1570 = vmatpush1.bf16.msra.mxu0 %v1553
        %1571 = vmatprep.subr.bf16.mxu0 0
        %1572 = vmatpush2.bf16.msra.mxu0 0
        %1573 = vmatprep.subr.bf16.mxu0 0
        %1574 = vmatpush2.bf16.msra.mxu0 0
        %1575 = vmatprep.subr.bf16.mxu0 0
        %1576 = vmatpush2.bf16.msra.mxu0 0
        %1577 = vmatprep.subr.bf16.mxu0 0
        %1578 = vmatpush2.bf16.msra.mxu0 0
        %1579 = vmatprep.subr.bf16.mxu0 0
        %1580 = vmatpush2.bf16.msra.mxu0 0
        %1581 = vmatprep.subr.bf16.mxu0 0
        %1582 = vmatpush2.bf16.msra.mxu0 0
        %1583 = vmatprep.subr.bf16.mxu0 0
        %1584 = vmatpush2.bf16.msra.mxu0 0
        %1585 = vmatprep.subr.bf16.mxu0 0
        %1586 = vmatpush2.bf16.msra.mxu0 0
        %1587 = vmatprep.mubr.bf16.mxu0 0
        %1588 = vmatmul.mubr.bf16.gmra.mxu0 %v1286
        %v1589 = vpop.f32.mrf.mxu0
        %v1590 = vadd.f32 %v738, %v1589
        %v1591 = vpop.f32.mrf.mxu0
        %v1592 = vpop.f32.mrf.mxu0
        %v1593 = vadd.f32 %v739, %v1592
        %v1594 = vpop.f32.mrf.mxu0
        %1595 = vdwg.mxu0
        %v1597 = vsel %vm793, %v1269, 0
        %1599 = vmatprep.subr.bf16.mxu0 0
        %1600 = vmatpush1.bf16.msra.mxu0 0
        %1601 = vmatprep.subr.bf16.mxu0 0
        %1602 = vmatpush1.bf16.msra.mxu0 0
        %1603 = vmatprep.subr.bf16.mxu0 0
        %1604 = vmatpush1.bf16.msra.mxu0 0
        %1605 = vmatprep.subr.bf16.mxu0 0
        %1606 = vmatpush1.bf16.msra.mxu0 0
        %1607 = vmatprep.subr.bf16.mxu0 0
        %1608 = vmatpush1.bf16.msra.mxu0 0
        %1609 = vmatprep.subr.bf16.mxu0 0
        %1610 = vmatpush1.bf16.msra.mxu0 0
        %1611 = vmatprep.subr.bf16.mxu0 0
        %1612 = vmatpush1.bf16.msra.mxu0 0
        %1613 = vmatprep.subr.bf16.mxu0 0
        %1614 = vmatpush1.bf16.msra.mxu0 %v1597
        %1615 = vmatprep.subr.bf16.mxu0 0
        %1616 = vmatpush2.bf16.msra.mxu0 0
        %1617 = vmatprep.subr.bf16.mxu0 0
        %1618 = vmatpush2.bf16.msra.mxu0 0
        %1619 = vmatprep.subr.bf16.mxu0 0
        %1620 = vmatpush2.bf16.msra.mxu0 0
        %1621 = vmatprep.subr.bf16.mxu0 0
        %1622 = vmatpush2.bf16.msra.mxu0 0
        %1623 = vmatprep.subr.bf16.mxu0 0
        %1624 = vmatpush2.bf16.msra.mxu0 0
        %1625 = vmatprep.subr.bf16.mxu0 0
        %1626 = vmatpush2.bf16.msra.mxu0 0
        %1627 = vmatprep.subr.bf16.mxu0 0
        %1628 = vmatpush2.bf16.msra.mxu0 0
        %1629 = vmatprep.subr.bf16.mxu0 0
        %1630 = vmatpush2.bf16.msra.mxu0 0
        %1631 = vmatprep.mubr.bf16.mxu0 0
        %1632 = vmatmul.mubr.bf16.gmra.mxu0 %v1286
        %v1633 = vpop.f32.mrf.mxu0
        %v1634 = vadd.f32 %v740, %v1633
        %v1635 = vpop.f32.mrf.mxu0
        %v1636 = vpop.f32.mrf.mxu0
        %v1637 = vadd.f32 %v741, %v1636
        %v1638 = vpop.f32.mrf.mxu0
        %1639 = vdwg.mxu0
        %v1641 = vsel %vm793, %v1270, 0
        %1643 = vmatprep.subr.bf16.mxu0 0
        %1644 = vmatpush1.bf16.msra.mxu0 0
        %1645 = vmatprep.subr.bf16.mxu0 0
        %1646 = vmatpush1.bf16.msra.mxu0 0
        %1647 = vmatprep.subr.bf16.mxu0 0
        %1648 = vmatpush1.bf16.msra.mxu0 0
        %1649 = vmatprep.subr.bf16.mxu0 0
        %1650 = vmatpush1.bf16.msra.mxu0 0
        %1651 = vmatprep.subr.bf16.mxu0 0
        %1652 = vmatpush1.bf16.msra.mxu0 0
        %1653 = vmatprep.subr.bf16.mxu0 0
        %1654 = vmatpush1.bf16.msra.mxu0 0
        %1655 = vmatprep.subr.bf16.mxu0 0
        %1656 = vmatpush1.bf16.msra.mxu0 0
        %1657 = vmatprep.subr.bf16.mxu0 0
        %1658 = vmatpush1.bf16.msra.mxu0 %v1641
        %1659 = vmatprep.subr.bf16.mxu0 0
        %1660 = vmatpush2.bf16.msra.mxu0 0
        %1661 = vmatprep.subr.bf16.mxu0 0
        %1662 = vmatpush2.bf16.msra.mxu0 0
        %1663 = vmatprep.subr.bf16.mxu0 0
        %1664 = vmatpush2.bf16.msra.mxu0 0
        %1665 = vmatprep.subr.bf16.mxu0 0
        %1666 = vmatpush2.bf16.msra.mxu0 0
        %1667 = vmatprep.subr.bf16.mxu0 0
        %1668 = vmatpush2.bf16.msra.mxu0 0
        %1669 = vmatprep.subr.bf16.mxu0 0
        %1670 = vmatpush2.bf16.msra.mxu0 0
        %1671 = vmatprep.subr.bf16.mxu0 0
        %1672 = vmatpush2.bf16.msra.mxu0 0
        %1673 = vmatprep.subr.bf16.mxu0 0
        %1674 = vmatpush2.bf16.msra.mxu0 0
        %1675 = vmatprep.mubr.bf16.mxu0 0
        %1676 = vmatmul.mubr.bf16.gmra.mxu0 %v1286
        %v1677 = vpop.f32.mrf.mxu0
        %v1678 = vadd.f32 %v742, %v1677
        %v1679 = vpop.f32.mrf.mxu0
        %v1680 = vpop.f32.mrf.mxu0
        %v1681 = vadd.f32 %v743, %v1680
        %v1682 = vpop.f32.mrf.mxu0
        %1683 = vdwg.mxu0
        %v1685 = vsel %vm793, %v1271, 0
        %1687 = vmatprep.subr.bf16.mxu0 0
        %1688 = vmatpush1.bf16.msra.mxu0 0
        %1689 = vmatprep.subr.bf16.mxu0 0
        %1690 = vmatpush1.bf16.msra.mxu0 0
        %1691 = vmatprep.subr.bf16.mxu0 0
        %1692 = vmatpush1.bf16.msra.mxu0 0
        %1693 = vmatprep.subr.bf16.mxu0 0
        %1694 = vmatpush1.bf16.msra.mxu0 0
        %1695 = vmatprep.subr.bf16.mxu0 0
        %1696 = vmatpush1.bf16.msra.mxu0 0
        %1697 = vmatprep.subr.bf16.mxu0 0
        %1698 = vmatpush1.bf16.msra.mxu0 0
        %1699 = vmatprep.subr.bf16.mxu0 0
        %1700 = vmatpush1.bf16.msra.mxu0 0
        %1701 = vmatprep.subr.bf16.mxu0 0
        %1702 = vmatpush1.bf16.msra.mxu0 %v1685
        %1703 = vmatprep.subr.bf16.mxu0 0
        %1704 = vmatpush2.bf16.msra.mxu0 0
        %1705 = vmatprep.subr.bf16.mxu0 0
        %1706 = vmatpush2.bf16.msra.mxu0 0
        %1707 = vmatprep.subr.bf16.mxu0 0
        %1708 = vmatpush2.bf16.msra.mxu0 0
        %1709 = vmatprep.subr.bf16.mxu0 0
        %1710 = vmatpush2.bf16.msra.mxu0 0
        %1711 = vmatprep.subr.bf16.mxu0 0
        %1712 = vmatpush2.bf16.msra.mxu0 0
        %1713 = vmatprep.subr.bf16.mxu0 0
        %1714 = vmatpush2.bf16.msra.mxu0 0
        %1715 = vmatprep.subr.bf16.mxu0 0
        %1716 = vmatpush2.bf16.msra.mxu0 0
        %1717 = vmatprep.subr.bf16.mxu0 0
        %1718 = vmatpush2.bf16.msra.mxu0 0
        %1719 = vmatprep.mubr.bf16.mxu0 0
        %1720 = vmatmul.mubr.bf16.gmra.mxu0 %v1286
        %v1721 = vpop.f32.mrf.mxu0
        %v1722 = vadd.f32 %v744, %v1721
        %v1723 = vpop.f32.mrf.mxu0
        %v1724 = vpop.f32.mrf.mxu0
        %v1725 = vadd.f32 %v745, %v1724
        %v1726 = vpop.f32.mrf.mxu0
        %1727 = vdwg.mxu0
        %v1729 = vsel %vm793, %v1272, 0
        %1731 = vmatprep.subr.bf16.mxu0 0
        %1732 = vmatpush1.bf16.msra.mxu0 0
        %1733 = vmatprep.subr.bf16.mxu0 0
        %1734 = vmatpush1.bf16.msra.mxu0 0
        %1735 = vmatprep.subr.bf16.mxu0 0
        %1736 = vmatpush1.bf16.msra.mxu0 0
        %1737 = vmatprep.subr.bf16.mxu0 0
        %1738 = vmatpush1.bf16.msra.mxu0 0
        %1739 = vmatprep.subr.bf16.mxu0 0
        %1740 = vmatpush1.bf16.msra.mxu0 0
        %1741 = vmatprep.subr.bf16.mxu0 0
        %1742 = vmatpush1.bf16.msra.mxu0 0
        %1743 = vmatprep.subr.bf16.mxu0 0
        %1744 = vmatpush1.bf16.msra.mxu0 0
        %1745 = vmatprep.subr.bf16.mxu0 0
        %1746 = vmatpush1.bf16.msra.mxu0 %v1729
        %1747 = vmatprep.subr.bf16.mxu0 0
        %1748 = vmatpush2.bf16.msra.mxu0 0
        %1749 = vmatprep.subr.bf16.mxu0 0
        %1750 = vmatpush2.bf16.msra.mxu0 0
        %1751 = vmatprep.subr.bf16.mxu0 0
        %1752 = vmatpush2.bf16.msra.mxu0 0
        %1753 = vmatprep.subr.bf16.mxu0 0
        %1754 = vmatpush2.bf16.msra.mxu0 0
        %1755 = vmatprep.subr.bf16.mxu0 0
        %1756 = vmatpush2.bf16.msra.mxu0 0
        %1757 = vmatprep.subr.bf16.mxu0 0
        %1758 = vmatpush2.bf16.msra.mxu0 0
        %1759 = vmatprep.subr.bf16.mxu0 0
        %1760 = vmatpush2.bf16.msra.mxu0 0
        %1761 = vmatprep.subr.bf16.mxu0 0
        %1762 = vmatpush2.bf16.msra.mxu0 0
        %1763 = vmatprep.mubr.bf16.mxu0 0
        %1764 = vmatmul.mubr.bf16.gmra.mxu0 %v1286
        %v1765 = vpop.f32.mrf.mxu0
        %v1766 = vadd.f32 %v746, %v1765
        %v1767 = vpop.f32.mrf.mxu0
        %v1768 = vpop.f32.mrf.mxu0
        %v1769 = vadd.f32 %v747, %v1768
        %v1770 = vpop.f32.mrf.mxu0
        %1771 = vdwg.mxu0
        %v1773 = vsel %vm793, %v1273, 0
        %1775 = vmatprep.subr.bf16.mxu0 0
        %1776 = vmatpush1.bf16.msra.mxu0 0
        %1777 = vmatprep.subr.bf16.mxu0 0
        %1778 = vmatpush1.bf16.msra.mxu0 0
        %1779 = vmatprep.subr.bf16.mxu0 0
        %1780 = vmatpush1.bf16.msra.mxu0 0
        %1781 = vmatprep.subr.bf16.mxu0 0
        %1782 = vmatpush1.bf16.msra.mxu0 0
        %1783 = vmatprep.subr.bf16.mxu0 0
        %1784 = vmatpush1.bf16.msra.mxu0 0
        %1785 = vmatprep.subr.bf16.mxu0 0
        %1786 = vmatpush1.bf16.msra.mxu0 0
        %1787 = vmatprep.subr.bf16.mxu0 0
        %1788 = vmatpush1.bf16.msra.mxu0 0
        %1789 = vmatprep.subr.bf16.mxu0 0
        %1790 = vmatpush1.bf16.msra.mxu0 %v1773
        %1791 = vmatprep.subr.bf16.mxu0 0
        %1792 = vmatpush2.bf16.msra.mxu0 0
        %1793 = vmatprep.subr.bf16.mxu0 0
        %1794 = vmatpush2.bf16.msra.mxu0 0
        %1795 = vmatprep.subr.bf16.mxu0 0
        %1796 = vmatpush2.bf16.msra.mxu0 0
        %1797 = vmatprep.subr.bf16.mxu0 0
        %1798 = vmatpush2.bf16.msra.mxu0 0
        %1799 = vmatprep.subr.bf16.mxu0 0
        %1800 = vmatpush2.bf16.msra.mxu0 0
        %1801 = vmatprep.subr.bf16.mxu0 0
        %1802 = vmatpush2.bf16.msra.mxu0 0
        %1803 = vmatprep.subr.bf16.mxu0 0
        %1804 = vmatpush2.bf16.msra.mxu0 0
        %1805 = vmatprep.subr.bf16.mxu0 0
        %1806 = vmatpush2.bf16.msra.mxu0 0
        %1807 = vmatprep.mubr.bf16.mxu0 0
        %1808 = vmatmul.mubr.bf16.gmra.mxu0 %v1286
        %v1809 = vpop.f32.mrf.mxu0
        %v1810 = vadd.f32 %v748, %v1809
        %v1811 = vpop.f32.mrf.mxu0
        %v1812 = vpop.f32.mrf.mxu0
        %v1813 = vadd.f32 %v749, %v1812
        %v1814 = vpop.f32.mrf.mxu0
        %1815 = vdwg.mxu0
        %v1817 = vsel %vm793, %v1274, 0
        %1819 = vmatprep.subr.bf16.mxu0 0
        %1820 = vmatpush1.bf16.msra.mxu0 0
        %1821 = vmatprep.subr.bf16.mxu0 0
        %1822 = vmatpush1.bf16.msra.mxu0 0
        %1823 = vmatprep.subr.bf16.mxu0 0
        %1824 = vmatpush1.bf16.msra.mxu0 0
        %1825 = vmatprep.subr.bf16.mxu0 0
        %1826 = vmatpush1.bf16.msra.mxu0 0
        %1827 = vmatprep.subr.bf16.mxu0 0
        %1828 = vmatpush1.bf16.msra.mxu0 0
        %1829 = vmatprep.subr.bf16.mxu0 0
        %1830 = vmatpush1.bf16.msra.mxu0 0
        %1831 = vmatprep.subr.bf16.mxu0 0
        %1832 = vmatpush1.bf16.msra.mxu0 0
        %1833 = vmatprep.subr.bf16.mxu0 0
        %1834 = vmatpush1.bf16.msra.mxu0 %v1817
        %1835 = vmatprep.subr.bf16.mxu0 0
        %1836 = vmatpush2.bf16.msra.mxu0 0
        %1837 = vmatprep.subr.bf16.mxu0 0
        %1838 = vmatpush2.bf16.msra.mxu0 0
        %1839 = vmatprep.subr.bf16.mxu0 0
        %1840 = vmatpush2.bf16.msra.mxu0 0
        %1841 = vmatprep.subr.bf16.mxu0 0
        %1842 = vmatpush2.bf16.msra.mxu0 0
        %1843 = vmatprep.subr.bf16.mxu0 0
        %1844 = vmatpush2.bf16.msra.mxu0 0
        %1845 = vmatprep.subr.bf16.mxu0 0
        %1846 = vmatpush2.bf16.msra.mxu0 0
        %1847 = vmatprep.subr.bf16.mxu0 0
        %1848 = vmatpush2.bf16.msra.mxu0 0
        %1849 = vmatprep.subr.bf16.mxu0 0
        %1850 = vmatpush2.bf16.msra.mxu0 0
        %1851 = vmatprep.mubr.bf16.mxu0 0
        %1852 = vmatmul.mubr.bf16.gmra.mxu0 %v1286
        %v1853 = vpop.f32.mrf.mxu0
        %v1854 = vadd.f32 %v750, %v1853
        %v1855 = vpop.f32.mrf.mxu0
        %v1856 = vpop.f32.mrf.mxu0
        %v1857 = vadd.f32 %v751, %v1856
        %v1858 = vpop.f32.mrf.mxu0
        %1859 = vdwg.mxu0
        %v1861 = vsel %vm793, %v1275, 0
        %1863 = vmatprep.subr.bf16.mxu0 0
        %1864 = vmatpush1.bf16.msra.mxu0 0
        %1865 = vmatprep.subr.bf16.mxu0 0
        %1866 = vmatpush1.bf16.msra.mxu0 0
        %1867 = vmatprep.subr.bf16.mxu0 0
        %1868 = vmatpush1.bf16.msra.mxu0 0
        %1869 = vmatprep.subr.bf16.mxu0 0
        %1870 = vmatpush1.bf16.msra.mxu0 0
        %1871 = vmatprep.subr.bf16.mxu0 0
        %1872 = vmatpush1.bf16.msra.mxu0 0
        %1873 = vmatprep.subr.bf16.mxu0 0
        %1874 = vmatpush1.bf16.msra.mxu0 0
        %1875 = vmatprep.subr.bf16.mxu0 0
        %1876 = vmatpush1.bf16.msra.mxu0 0
        %1877 = vmatprep.subr.bf16.mxu0 0
        %1878 = vmatpush1.bf16.msra.mxu0 %v1861
        %1879 = vmatprep.subr.bf16.mxu0 0
        %1880 = vmatpush2.bf16.msra.mxu0 0
        %1881 = vmatprep.subr.bf16.mxu0 0
        %1882 = vmatpush2.bf16.msra.mxu0 0
        %1883 = vmatprep.subr.bf16.mxu0 0
        %1884 = vmatpush2.bf16.msra.mxu0 0
        %1885 = vmatprep.subr.bf16.mxu0 0
        %1886 = vmatpush2.bf16.msra.mxu0 0
        %1887 = vmatprep.subr.bf16.mxu0 0
        %1888 = vmatpush2.bf16.msra.mxu0 0
        %1889 = vmatprep.subr.bf16.mxu0 0
        %1890 = vmatpush2.bf16.msra.mxu0 0
        %1891 = vmatprep.subr.bf16.mxu0 0
        %1892 = vmatpush2.bf16.msra.mxu0 0
        %1893 = vmatprep.subr.bf16.mxu0 0
        %1894 = vmatpush2.bf16.msra.mxu0 0
        %1895 = vmatprep.mubr.bf16.mxu0 0
        %1896 = vmatmul.mubr.bf16.gmra.mxu0 %v1286
        %v1897 = vpop.f32.mrf.mxu0
        %v1898 = vadd.f32 %v752, %v1897
        %v1899 = vpop.f32.mrf.mxu0
        %v1900 = vpop.f32.mrf.mxu0
        %v1901 = vadd.f32 %v753, %v1900
        %v1902 = vpop.f32.mrf.mxu0
        %1903 = vdwg.mxu0
        %v1905 = vsel %vm793, %v1276, 0
        %1907 = vmatprep.subr.bf16.mxu0 0
        %1908 = vmatpush1.bf16.msra.mxu0 0
        %1909 = vmatprep.subr.bf16.mxu0 0
        %1910 = vmatpush1.bf16.msra.mxu0 0
        %1911 = vmatprep.subr.bf16.mxu0 0
        %1912 = vmatpush1.bf16.msra.mxu0 0
        %1913 = vmatprep.subr.bf16.mxu0 0
        %1914 = vmatpush1.bf16.msra.mxu0 0
        %1915 = vmatprep.subr.bf16.mxu0 0
        %1916 = vmatpush1.bf16.msra.mxu0 0
        %1917 = vmatprep.subr.bf16.mxu0 0
        %1918 = vmatpush1.bf16.msra.mxu0 0
        %1919 = vmatprep.subr.bf16.mxu0 0
        %1920 = vmatpush1.bf16.msra.mxu0 0
        %1921 = vmatprep.subr.bf16.mxu0 0
        %1922 = vmatpush1.bf16.msra.mxu0 %v1905
        %1923 = vmatprep.subr.bf16.mxu0 0
        %1924 = vmatpush2.bf16.msra.mxu0 0
        %1925 = vmatprep.subr.bf16.mxu0 0
        %1926 = vmatpush2.bf16.msra.mxu0 0
        %1927 = vmatprep.subr.bf16.mxu0 0
        %1928 = vmatpush2.bf16.msra.mxu0 0
        %1929 = vmatprep.subr.bf16.mxu0 0
        %1930 = vmatpush2.bf16.msra.mxu0 0
        %1931 = vmatprep.subr.bf16.mxu0 0
        %1932 = vmatpush2.bf16.msra.mxu0 0
        %1933 = vmatprep.subr.bf16.mxu0 0
        %1934 = vmatpush2.bf16.msra.mxu0 0
        %1935 = vmatprep.subr.bf16.mxu0 0
        %1936 = vmatpush2.bf16.msra.mxu0 0
        %1937 = vmatprep.subr.bf16.mxu0 0
        %1938 = vmatpush2.bf16.msra.mxu0 0
        %1939 = vmatprep.mubr.bf16.mxu0 0
        %1940 = vmatmul.mubr.bf16.gmra.mxu0 %v1286
        %v1941 = vpop.f32.mrf.mxu0
        %v1942 = vadd.f32 %v754, %v1941
        %v1943 = vpop.f32.mrf.mxu0
        %v1944 = vpop.f32.mrf.mxu0
        %v1945 = vadd.f32 %v755, %v1944
        %v1946 = vpop.f32.mrf.mxu0
        %1947 = vdwg.mxu0
        %v1949 = vsel %vm793, %v1277, 0
        %1951 = vmatprep.subr.bf16.mxu0 0
        %1952 = vmatpush1.bf16.msra.mxu0 0
        %1953 = vmatprep.subr.bf16.mxu0 0
        %1954 = vmatpush1.bf16.msra.mxu0 0
        %1955 = vmatprep.subr.bf16.mxu0 0
        %1956 = vmatpush1.bf16.msra.mxu0 0
        %1957 = vmatprep.subr.bf16.mxu0 0
        %1958 = vmatpush1.bf16.msra.mxu0 0
        %1959 = vmatprep.subr.bf16.mxu0 0
        %1960 = vmatpush1.bf16.msra.mxu0 0
        %1961 = vmatprep.subr.bf16.mxu0 0
        %1962 = vmatpush1.bf16.msra.mxu0 0
        %1963 = vmatprep.subr.bf16.mxu0 0
        %1964 = vmatpush1.bf16.msra.mxu0 0
        %1965 = vmatprep.subr.bf16.mxu0 0
        %1966 = vmatpush1.bf16.msra.mxu0 %v1949
        %1967 = vmatprep.subr.bf16.mxu0 0
        %1968 = vmatpush2.bf16.msra.mxu0 0
        %1969 = vmatprep.subr.bf16.mxu0 0
        %1970 = vmatpush2.bf16.msra.mxu0 0
        %1971 = vmatprep.subr.bf16.mxu0 0
        %1972 = vmatpush2.bf16.msra.mxu0 0
        %1973 = vmatprep.subr.bf16.mxu0 0
        %1974 = vmatpush2.bf16.msra.mxu0 0
        %1975 = vmatprep.subr.bf16.mxu0 0
        %1976 = vmatpush2.bf16.msra.mxu0 0
        %1977 = vmatprep.subr.bf16.mxu0 0
        %1978 = vmatpush2.bf16.msra.mxu0 0
        %1979 = vmatprep.subr.bf16.mxu0 0
        %1980 = vmatpush2.bf16.msra.mxu0 0
        %1981 = vmatprep.subr.bf16.mxu0 0
        %1982 = vmatpush2.bf16.msra.mxu0 0
        %1983 = vmatprep.mubr.bf16.mxu0 0
        %1984 = vmatmul.mubr.bf16.gmra.mxu0 %v1286
        %v1985 = vpop.f32.mrf.mxu0
        %v1986 = vadd.f32 %v756, %v1985
        %v1987 = vpop.f32.mrf.mxu0
        %v1988 = vpop.f32.mrf.mxu0
        %v1989 = vadd.f32 %v757, %v1988
        %v1990 = vpop.f32.mrf.mxu0
        %1991 = vdwg.mxu0
        %1992 = vst [vmem:[%s356] sm:$0xff] %v1326
        %1993 = vst [vmem:[%s356 + $0x8] sm:$0xff] %v1329
        %1994 = vst [vmem:[%s356 + $0x10] sm:$0xff] %v1370
        %1995 = vst [vmem:[%s356 + $0x18] sm:$0xff] %v1373
        %1996 = vst [vmem:[%s356 + $0x20] sm:$0xff] %v1414
        %1997 = vst [vmem:[%s356 + $0x28] sm:$0xff] %v1417
        %1998 = vst [vmem:[%s356 + $0x30] sm:$0xff] %v1458
        %1999 = vst [vmem:[%s356 + $0x38] sm:$0xff] %v1461
        %2000 = vst [vmem:[%s356 + $0x40] sm:$0xff] %v1502
        %2001 = vst [vmem:[%s356 + $0x48] sm:$0xff] %v1505
        %2002 = vst [vmem:[%s356 + $0x50] sm:$0xff] %v1546
        %2003 = vst [vmem:[%s356 + $0x58] sm:$0xff] %v1549
        %2004 = vst [vmem:[%s356 + $0x60] sm:$0xff] %v1590
        %2005 = vst [vmem:[%s356 + $0x68] sm:$0xff] %v1593
        %2006 = vst [vmem:[%s356 + $0x70] sm:$0xff] %v1634
        %2007 = vst [vmem:[%s356 + $0x78] sm:$0xff] %v1637
        %2008 = vst [vmem:[%s356 + $0x80] sm:$0xff] %v1678
        %2009 = vst [vmem:[%s356 + $0x88] sm:$0xff] %v1681
        %2010 = vst [vmem:[%s356 + $0x90] sm:$0xff] %v1722
        %2011 = vst [vmem:[%s356 + $0x98] sm:$0xff] %v1725
        %2012 = vst [vmem:[%s356 + $0xa0] sm:$0xff] %v1766
        %2013 = vst [vmem:[%s356 + $0xa8] sm:$0xff] %v1769
        %2014 = vst [vmem:[%s356 + $0xb0] sm:$0xff] %v1810
        %2015 = vst [vmem:[%s356 + $0xb8] sm:$0xff] %v1813
        %2016 = vst [vmem:[%s356 + $0xc0] sm:$0xff] %v1854
        %2017 = vst [vmem:[%s356 + $0xc8] sm:$0xff] %v1857
        %2018 = vst [vmem:[%s356 + $0xd0] sm:$0xff] %v1898
        %2019 = vst [vmem:[%s356 + $0xd8] sm:$0xff] %v1901
        %2020 = vst [vmem:[%s356 + $0xe0] sm:$0xff] %v1942
        %2021 = vst [vmem:[%s356 + $0xe8] sm:$0xff] %v1945
        %2022 = vst [vmem:[%s356 + $0xf0] sm:$0xff] %v1986
        %2023 = vst [vmem:[%s356 + $0xf8] sm:$0xff] %v1989
        %s2024 = sand.u32 %s191, 1
        %s2025 = scalar_lea.sflag [#allocation4], %s2024
        %s2026 = sand.u32 %s191, 1
        %s2027 = smul.addr %s2026, 256
        %s2028 = scalar_lea.vmem [#allocation8], %s2027
        // Predicated region
        $region57: #{tpu_custom_call.1} parent=43 // pred_check
          %p2029 = pneg %p201
        $region58: #{tpu_custom_call.1} parent=43 // pred_check_branch
          %2031 = sbr.rel (%p2029) target = $region60
        $region59: #{tpu_custom_call.1} parent=43 // pred_region
          %s2032 = smul.u32 16, %s31
          %s2034 = ssub.s32 4096, 4096
          %2035 = vsyncadd %s2025, %s2034
          %s2036 = smul.addr %s2032, 2
          %s2037 = smul.addr %s30, 32
          %s2038 = sadd.s32 %s2036, %s2037
          %s2039 = smul.addr %s2038, 128
          %s2040 = scalar_lea.hbm %s6, %s2039
          %s2041 = sshll.u32 %s2028, 4
          %s2042 = int_to_ptr.vmem [resolvable:$true] %s2041
          %2047 = dma.vmem_to_hbm [thread:$0]  %s2042, 4096, %s2040, %s2025, 128, 128, 8
        $region60: #{tpu_custom_call.1} parent=43 // pred_fallthru
          _
      $region44: #{tpu_custom_call.1} parent=5 // pred_fallthru
        _
      %p2048 = scmp.le.s32.totalorder 2, %s21
      // Predicated region
      $region61: #{tpu_custom_call.1} parent=5 // pred_check
        %p2049 = pneg %p2048
      $region62: #{tpu_custom_call.1} parent=5 // pred_check_branch
        %2051 = sbr.rel (%p2049) target = $region64
      $region63: #{tpu_custom_call.1} parent=5 // pred_region
        %s2052 = ssub.s32 %s21, 2
        // Predicated region
        $region65: #{tpu_custom_call.1} parent=63 // pred_check
          %p2053 = pneg %p207
        $region66: #{tpu_custom_call.1} parent=63 // pred_check_branch
          %2055 = sbr.rel (%p2053) target = $region68
        $region67: #{tpu_custom_call.1} parent=63 // pred_region
          %s2056 = sand.u32 %s192, 1
          %s2057 = scalar_lea.sflag [#allocation4], %s2056
          %s2058 = sand.u32 %s192, 1
          %s2059 = smul.addr %s2058, 256
          %s2060 = scalar_lea.vmem [#allocation8], %s2059
          %2061 = dma.done %s2057, 4096
        $region68: #{tpu_custom_call.1} parent=63 // pred_fallthru
          _
      $region64: #{tpu_custom_call.1} parent=5 // pred_fallthru
        _
    $region6: #{tpu_custom_call.1} parent=1 // loop_footer
      %s25 = sadd.s32 1, %s21
    $region7: #{tpu_custom_call.1} parent=1 // loop_footer_branch
      %20 = sbr.rel target = $region3
    $region8: #{tpu_custom_call.1} parent=1 // loop_exit
      _
    %2062 = vsyncpa [#allocation3], 1
    %s2063 = scalar_lea.sflag [#allocation3], 1
    %2064 = vsyncpa %s2063, 1
    %2065 = vsyncpa [#allocation6], 1
    %s2066 = scalar_lea.sflag [#allocation6], 1
    %2067 = vsyncpa %s2066, 1
    %2068 = vsyncpa [#allocation4], 1
    %s2069 = scalar_lea.sflag [#allocation4], 1
    %2070 = vsyncpa %s2069, 1

</llo_original>
